<compile_context>
chip_gen: v5e
topology: v5e:2x2
jax: 0.10.0
libtpu: 0.0.40
codegen_flags: <defaults>
</compile_context>

<pallas_src>
import functools

import jax
import jax.numpy as jnp
from jax import lax
from jax.experimental import pallas as pl
from jax.experimental.pallas import tpu as pltpu


def _mmd_kernel(src_ref, tgt_ref, out_ref, ss_acc, st_acc, tt_acc, *,
                batch, kernel_mul, kernel_num, fix_sigma):
    k = pl.program_id(0)

    @pl.when(k == 0)
    def _():
        ss_acc[...] = jnp.zeros_like(ss_acc)
        st_acc[...] = jnp.zeros_like(st_acc)
        tt_acc[...] = jnp.zeros_like(tt_acc)

    # Accumulate the three Gram blocks over feature tiles (MXU, f32 accum).
    # Tiles go to the MXU in their native dtype; no VPU cast needed.
    s = src_ref[...]                                               # (B, tk)
    t = tgt_ref[...]                                               # (B, tk)
    dims = (((1,), (1,)), ((), ()))                                # contract last axes
    ss_acc[...] += lax.dot_general(s, s, dims, preferred_element_type=jnp.float32)
    st_acc[...] += lax.dot_general(s, t, dims, preferred_element_type=jnp.float32)
    tt_acc[...] += lax.dot_general(t, t, dims, preferred_element_type=jnp.float32)

    @pl.when(k == pl.num_programs(0) - 1)
    def _():
        b = batch
        n = 2 * b
        ss = ss_acc[...]                                           # (B, B)
        st = st_acc[...]
        tt = tt_acc[...]

        # Squared norms from the Gram diagonals (shared mask, cheap reduces).
        row = lax.broadcasted_iota(jnp.int32, (b, b), 0)
        col = lax.broadcasted_iota(jnp.int32, (b, b), 1)
        diag = row == col
        ss_diag = jnp.where(diag, ss, 0.0)
        tt_diag = jnp.where(diag, tt, 0.0)
        sq_s_col = jnp.sum(ss_diag, axis=1, keepdims=True)         # (B, 1)
        sq_s_row = jnp.sum(ss_diag, axis=0, keepdims=True)         # (1, B)
        sq_t_col = jnp.sum(tt_diag, axis=1, keepdims=True)
        sq_t_row = jnp.sum(tt_diag, axis=0, keepdims=True)

        # Pairwise squared L2 distances per block, clamped >= 0 against
        # floating-point cancellation in the Gram trick.
        l2_ss = jnp.maximum(sq_s_col + sq_s_row - 2.0 * ss, 0.0)
        l2_tt = jnp.maximum(sq_t_col + sq_t_row - 2.0 * tt, 0.0)
        l2_st = jnp.maximum(sq_s_col + sq_t_row - 2.0 * st, 0.0)

        # Data-dependent bandwidth (same as PyTorch: sum of all N*N distances
        # divided by N^2 - N). The off-block distances appear twice (ST, TS).
        if fix_sigma is not None:
            bandwidth = jnp.float32(fix_sigma)
        else:
            l2_total = jnp.sum(l2_ss) + jnp.sum(l2_tt) + 2.0 * jnp.sum(l2_st)
            bandwidth = l2_total / jnp.float32(n * n - n)
        bandwidth = bandwidth / jnp.float32(kernel_mul ** (kernel_num // 2))

        # loss = mean(XX + YY - XY - YX); sum(XY) == sum(YX) by symmetry.
        # Accumulate the reduction directly (no materialized kernel matrix);
        # scalar negative inverse bandwidths avoid per-element division, the
        # exps go to the EUP.
        loss = jnp.float32(0.0)
        for i in range(kernel_num):
            neg_inv_bw = jnp.float32(-1.0) / (bandwidth * jnp.float32(kernel_mul ** i))
            loss = (loss
                    + jnp.sum(jnp.exp(l2_ss * neg_inv_bw))
                    + jnp.sum(jnp.exp(l2_tt * neg_inv_bw))
                    - 2.0 * jnp.sum(jnp.exp(l2_st * neg_inv_bw)))
        out_ref[...] = jnp.reshape(loss / jnp.float32(b * b), (1, 1))


def _choose_tiling(batch, f, itemsize):
    """Pick a lane-aligned feature tile tk and padded feature size f_pad."""
    lane = 128
    f128 = ((f + lane - 1) // lane) * lane
    # Budget ~16 MiB for the double-buffered (source + target) input tiles.
    input_budget = 16 * 1024 * 1024
    per_col = 2 * 2 * batch * itemsize
    tk_cap = input_budget // max(per_col, 1)
    tk_cap = min(max(tk_cap, lane), 32768)
    tk_cap = (tk_cap // lane) * lane
    if f128 <= tk_cap:
        return f128, f128
    num_tiles = (f128 + tk_cap - 1) // tk_cap
    tk = (f128 + num_tiles - 1) // num_tiles
    tk = ((tk + lane - 1) // lane) * lane
    return tk, num_tiles * tk


def mmd_loss_zhao(source, target, *, kernel_mul=2.0, kernel_num=5,
                  fix_sigma=None):
    if source.ndim == 4:
        source = source.reshape(source.shape[0], -1)
        target = target.reshape(target.shape[0], -1)
    assert source.shape == target.shape, "source/target must have equal shapes"
    b, f = source.shape

    # Keep float inputs in their HBM dtype (bf16 halves HBM traffic and is fed
    # to the MXU directly); anything the MXU can't take natively goes to f32.
    if source.dtype not in (jnp.float32, jnp.bfloat16):
        source = source.astype(jnp.float32)
        target = target.astype(jnp.float32)
    itemsize = jnp.dtype(source.dtype).itemsize

    tk, f_pad = _choose_tiling(b, f, itemsize)
    if f_pad != f:
        # Zero columns do not change the Gram matrix / pairwise distances.
        source = jnp.pad(source, ((0, 0), (0, f_pad - f)))
        target = jnp.pad(target, ((0, 0), (0, f_pad - f)))
    num_tiles = f_pad // tk

    # Explicit VMEM budget: double-buffered input tiles + Gram scratch +
    # epilogue temporaries + headroom (fits v7x's 64 MiB physical VMEM).
    need = (2 * 2 * b * tk * itemsize        # double-buffered src+tgt tiles
            + 3 * b * b * 4                  # Gram-block scratch
            + 12 * b * b * 4                 # epilogue temporaries
            + (2 << 20))                     # headroom
    vmem_limit = int(min(max(need, 16 << 20), 60 << 20))

    kernel = functools.partial(
        _mmd_kernel, batch=b, kernel_mul=kernel_mul,
        kernel_num=kernel_num, fix_sigma=fix_sigma)

    out = pl.pallas_call(
        kernel,
        out_shape=jax.ShapeDtypeStruct((1, 1), jnp.float32),
        grid_spec=pltpu.PrefetchScalarGridSpec(
            num_scalar_prefetch=0,
            grid=(num_tiles,),
            in_specs=[pl.BlockSpec((b, tk), lambda k: (0, k)),
                      pl.BlockSpec((b, tk), lambda k: (0, k))],
            out_specs=pl.BlockSpec((1, 1), lambda k: (0, 0)),
            scratch_shapes=[pltpu.VMEM((b, b), jnp.float32)] * 3,
        ),
        compiler_params=pltpu.CompilerParams(
            dimension_semantics=("arbitrary",),
            vmem_limit_bytes=vmem_limit),
    )(source, target)
    return out[0, 0]


def _mmd_reference(source, target, kernel_mul=2.0, kernel_num=5,
                   fix_sigma=None):
    # pure-JAX reference mirroring the PyTorch module
    if source.ndim == 4:
        source = source.reshape(source.shape[0], -1)
        target = target.reshape(target.shape[0], -1)
    b = source.shape[0]
    total = jnp.concatenate([source, target], axis=0).astype(jnp.float32)
    n = total.shape[0]
    diff = total[None, :, :] - total[:, None, :]
    l2 = jnp.sum(diff ** 2, axis=2)
    if fix_sigma is not None:
        bw = jnp.float32(fix_sigma)
    else:
        bw = jnp.sum(l2) / (n * n - n)
    bw = bw / (kernel_mul ** (kernel_num // 2))
    kern = sum(jnp.exp(-l2 / (bw * kernel_mul ** i)) for i in range(kernel_num))
    xx = kern[:b, :b]
    yy = kern[b:, b:]
    xy = kern[:b, b:]
    yx = kern[b:, :b]
    return jnp.mean(xx + yy - xy - yx)


if __name__ == "__main__":
    key = jax.random.PRNGKey(0)
    k1, k2 = jax.random.split(key)
    # matches the 4-D NCHW branch of forward(): (B, C, H, W)
    source = jax.random.normal(k1, (2, 4, 16, 16), dtype=jnp.float32)
    target = jax.random.normal(k2, (2, 4, 16, 16), dtype=jnp.float32) + 0.5

    loss = mmd_loss_zhao(source, target)
    loss = jax.block_until_ready(loss)

    ref = jax.block_until_ready(_mmd_reference(source, target))
    assert jnp.allclose(loss, ref, rtol=1e-4, atol=1e-5), (loss, ref)

    print("KERNEL_OK")
</pallas_src>

<mosaic_0001>
module attributes {stable_mosaic.version = 11 : i64} {
  func.func @_mmd_kernel(%arg0: i32, %arg1: memref<2x1024xf32, #tpu.memory_space<vmem>>, %arg2: memref<2x1024xf32, #tpu.memory_space<vmem>>, %arg3: memref<1x1xf32, #tpu.memory_space<vmem>>, %arg4: memref<2x2xf32, #tpu.memory_space<vmem>>, %arg5: memref<2x2xf32, #tpu.memory_space<vmem>>, %arg6: memref<2x2xf32, #tpu.memory_space<vmem>>) attributes {dimension_semantics = [#tpu.dimension_semantics<arbitrary>], iteration_bounds = array<i64: 1>, scalar_prefetch = 0 : i64, scratch_operands = 3 : i64, tpu.core_type = #tpu.core_type<tc>, window_params = [{transform_indices = @transform_0, window_bounds = array<i64: 2, 1024>}, {transform_indices = @transform_1, window_bounds = array<i64: 2, 1024>}, {pipeline_mode = #tpu.pipeline_mode<synchronous>, transform_indices = @transform_2, window_bounds = array<i64: 1, 1>}]} {
    %c0_i32 = arith.constant 0 : i32
    %0 = arith.cmpi eq, %arg0, %c0_i32 : i32
    %1 = arith.extui %0 : i1 to i32
    %c0_i32_0 = arith.constant 0 : i32
    %2 = arith.cmpi ne, %1, %c0_i32_0 : i32
    scf.if %2 {
      %cst_20 = arith.constant 0.000000e+00 : f32
      %20 = vector.broadcast %cst_20 : f32 to vector<2x2xf32>
      %c0_21 = arith.constant 0 : index
      %c0_22 = arith.constant 0 : index
      %21 = vector.load %arg4[%c0_21, %c0_22] : memref<2x2xf32, #tpu.memory_space<vmem>>, vector<2x2xf32>
      tpu.vector_store %arg4[%c0_21, %c0_22], %20 {strides = array<i32>} : memref<2x2xf32, #tpu.memory_space<vmem>>, vector<2x2xf32>,
      %cst_23 = arith.constant 0.000000e+00 : f32
      %22 = vector.broadcast %cst_23 : f32 to vector<2x2xf32>
      %c0_24 = arith.constant 0 : index
      %c0_25 = arith.constant 0 : index
      %23 = vector.load %arg5[%c0_24, %c0_25] : memref<2x2xf32, #tpu.memory_space<vmem>>, vector<2x2xf32>
      tpu.vector_store %arg5[%c0_24, %c0_25], %22 {strides = array<i32>} : memref<2x2xf32, #tpu.memory_space<vmem>>, vector<2x2xf32>,
      %cst_26 = arith.constant 0.000000e+00 : f32
      %24 = vector.broadcast %cst_26 : f32 to vector<2x2xf32>
      %c0_27 = arith.constant 0 : index
      %c0_28 = arith.constant 0 : index
      %25 = vector.load %arg6[%c0_27, %c0_28] : memref<2x2xf32, #tpu.memory_space<vmem>>, vector<2x2xf32>
      tpu.vector_store %arg6[%c0_27, %c0_28], %24 {strides = array<i32>} : memref<2x2xf32, #tpu.memory_space<vmem>>, vector<2x2xf32>,
    } else {
    }
    %c0 = arith.constant 0 : index
    %c0_1 = arith.constant 0 : index
    %3 = vector.load %arg1[%c0, %c0_1] : memref<2x1024xf32, #tpu.memory_space<vmem>>, vector<2x1024xf32>
    %c0_2 = arith.constant 0 : index
    %c0_3 = arith.constant 0 : index
    %4 = vector.load %arg2[%c0_2, %c0_3] : memref<2x1024xf32, #tpu.memory_space<vmem>>, vector<2x1024xf32>
    %c0_4 = arith.constant 0 : index
    %c0_5 = arith.constant 0 : index
    %5 = vector.load %arg4[%c0_4, %c0_5] : memref<2x2xf32, #tpu.memory_space<vmem>>, vector<2x2xf32>
    %cst = arith.constant dense<0.000000e+00> : vector<2x2xf32>
    %6 = tpu.matmul %3, %3, %cst {dimension_numbers = #tpu.dot_dimension_numbers<[1], [1], [0], [0], [0, 0, 1, 0], [], []>} : vector<2x1024xf32>, vector<2x1024xf32>, vector<2x2xf32> -> vector<2x2xf32>
    %7 = arith.addf %5, %6 : vector<2x2xf32>
    %c0_6 = arith.constant 0 : index
    %c0_7 = arith.constant 0 : index
    %8 = vector.load %arg4[%c0_6, %c0_7] : memref<2x2xf32, #tpu.memory_space<vmem>>, vector<2x2xf32>
    tpu.vector_store %arg4[%c0_6, %c0_7], %7 {strides = array<i32>} : memref<2x2xf32, #tpu.memory_space<vmem>>, vector<2x2xf32>,
    %c0_8 = arith.constant 0 : index
    %c0_9 = arith.constant 0 : index
    %9 = vector.load %arg5[%c0_8, %c0_9] : memref<2x2xf32, #tpu.memory_space<vmem>>, vector<2x2xf32>
    %cst_10 = arith.constant dense<0.000000e+00> : vector<2x2xf32>
    %10 = tpu.matmul %3, %4, %cst_10 {dimension_numbers = #tpu.dot_dimension_numbers<[1], [1], [0], [0], [0, 0, 1, 0], [], []>} : vector<2x1024xf32>, vector<2x1024xf32>, vector<2x2xf32> -> vector<2x2xf32>
    %11 = arith.addf %9, %10 : vector<2x2xf32>
    %c0_11 = arith.constant 0 : index
    %c0_12 = arith.constant 0 : index
    %12 = vector.load %arg5[%c0_11, %c0_12] : memref<2x2xf32, #tpu.memory_space<vmem>>, vector<2x2xf32>
    tpu.vector_store %arg5[%c0_11, %c0_12], %11 {strides = array<i32>} : memref<2x2xf32, #tpu.memory_space<vmem>>, vector<2x2xf32>,
    %c0_13 = arith.constant 0 : index
    %c0_14 = arith.constant 0 : index
    %13 = vector.load %arg6[%c0_13, %c0_14] : memref<2x2xf32, #tpu.memory_space<vmem>>, vector<2x2xf32>
    %cst_15 = arith.constant dense<0.000000e+00> : vector<2x2xf32>
    %14 = tpu.matmul %4, %4, %cst_15 {dimension_numbers = #tpu.dot_dimension_numbers<[1], [1], [0], [0], [0, 0, 1, 0], [], []>} : vector<2x1024xf32>, vector<2x1024xf32>, vector<2x2xf32> -> vector<2x2xf32>
    %15 = arith.addf %13, %14 : vector<2x2xf32>
    %c0_16 = arith.constant 0 : index
    %c0_17 = arith.constant 0 : index
    %16 = vector.load %arg6[%c0_16, %c0_17] : memref<2x2xf32, #tpu.memory_space<vmem>>, vector<2x2xf32>
    tpu.vector_store %arg6[%c0_16, %c0_17], %15 {strides = array<i32>} : memref<2x2xf32, #tpu.memory_space<vmem>>, vector<2x2xf32>,
    %c0_i32_18 = arith.constant 0 : i32
    %17 = arith.cmpi eq, %arg0, %c0_i32_18 : i32
    %18 = arith.extui %17 : i1 to i32
    %c0_i32_19 = arith.constant 0 : i32
    %19 = arith.cmpi ne, %18, %c0_i32_19 : i32
    scf.if %19 {
      %c0_20 = arith.constant 0 : index
      %c0_21 = arith.constant 0 : index
      %20 = vector.load %arg4[%c0_20, %c0_21] : memref<2x2xf32, #tpu.memory_space<vmem>>, vector<2x2xf32>
      %c0_22 = arith.constant 0 : index
      %c0_23 = arith.constant 0 : index
      %21 = vector.load %arg5[%c0_22, %c0_23] : memref<2x2xf32, #tpu.memory_space<vmem>>, vector<2x2xf32>
      %c0_24 = arith.constant 0 : index
      %c0_25 = arith.constant 0 : index
      %22 = vector.load %arg6[%c0_24, %c0_25] : memref<2x2xf32, #tpu.memory_space<vmem>>, vector<2x2xf32>
      %23 = tpu.iota {dimensions = array<i32: 0>} : vector<2x2xi32>
      %24 = tpu.iota {dimensions = array<i32: 1>} : vector<2x2xi32>
      %25 = arith.cmpi eq, %23, %24 : vector<2x2xi32>
      %cst_26 = arith.constant 0.000000e+00 : f32
      %26 = vector.broadcast %cst_26 : f32 to vector<2x2xf32>
      %27 = arith.select %25, %20, %26 : vector<2x2xi1>, vector<2x2xf32>
      %cst_27 = arith.constant 0.000000e+00 : f32
      %28 = vector.broadcast %cst_27 : f32 to vector<2x2xf32>
      %29 = arith.select %25, %22, %28 : vector<2x2xi1>, vector<2x2xf32>
      %cst_28 = arith.constant dense<0.000000e+00> : vector<2xf32>
      %30 = vector.multi_reduction <add>, %27, %cst_28 [1] : vector<2x2xf32> to vector<2xf32>
      %31 = vector.shape_cast %30 : vector<2xf32> to vector<2x1xf32>
      %cst_29 = arith.constant dense<0.000000e+00> : vector<2xf32>
      %32 = vector.multi_reduction <add>, %27, %cst_29 [0] : vector<2x2xf32> to vector<2xf32>
      %33 = vector.shape_cast %32 : vector<2xf32> to vector<1x2xf32>
      %cst_30 = arith.constant dense<0.000000e+00> : vector<2xf32>
      %34 = vector.multi_reduction <add>, %29, %cst_30 [1] : vector<2x2xf32> to vector<2xf32>
      %35 = vector.shape_cast %34 : vector<2xf32> to vector<2x1xf32>
      %cst_31 = arith.constant dense<0.000000e+00> : vector<2xf32>
      %36 = vector.multi_reduction <add>, %29, %cst_31 [0] : vector<2x2xf32> to vector<2xf32>
      %37 = vector.shape_cast %36 : vector<2xf32> to vector<1x2xf32>
      %38 = vector.broadcast %31 : vector<2x1xf32> to vector<2x2xf32>
      %39 = vector.broadcast %33 : vector<1x2xf32> to vector<2x2xf32>
      %40 = arith.addf %38, %39 : vector<2x2xf32>
      %cst_32 = arith.constant 2.000000e+00 : f32
      %41 = vector.broadcast %cst_32 : f32 to vector<2x2xf32>
      %42 = arith.mulf %41, %20 : vector<2x2xf32>
      %43 = arith.subf %40, %42 : vector<2x2xf32>
      %cst_33 = arith.constant 0.000000e+00 : f32
      %44 = vector.broadcast %cst_33 : f32 to vector<2x2xf32>
      %45 = arith.maximumf %43, %44 : vector<2x2xf32>
      %46 = vector.broadcast %35 : vector<2x1xf32> to vector<2x2xf32>
      %47 = vector.broadcast %37 : vector<1x2xf32> to vector<2x2xf32>
      %48 = arith.addf %46, %47 : vector<2x2xf32>
      %cst_34 = arith.constant 2.000000e+00 : f32
      %49 = vector.broadcast %cst_34 : f32 to vector<2x2xf32>
      %50 = arith.mulf %49, %22 : vector<2x2xf32>
      %51 = arith.subf %48, %50 : vector<2x2xf32>
      %cst_35 = arith.constant 0.000000e+00 : f32
      %52 = vector.broadcast %cst_35 : f32 to vector<2x2xf32>
      %53 = arith.maximumf %51, %52 : vector<2x2xf32>
      %54 = vector.broadcast %31 : vector<2x1xf32> to vector<2x2xf32>
      %55 = vector.broadcast %37 : vector<1x2xf32> to vector<2x2xf32>
      %56 = arith.addf %54, %55 : vector<2x2xf32>
      %cst_36 = arith.constant 2.000000e+00 : f32
      %57 = vector.broadcast %cst_36 : f32 to vector<2x2xf32>
      %58 = arith.mulf %57, %21 : vector<2x2xf32>
      %59 = arith.subf %56, %58 : vector<2x2xf32>
      %cst_37 = arith.constant 0.000000e+00 : f32
      %60 = vector.broadcast %cst_37 : f32 to vector<2x2xf32>
      %61 = arith.maximumf %59, %60 : vector<2x2xf32>
      %62 = vector.shape_cast %45 : vector<2x2xf32> to vector<1x2x2xf32>
      %cst_38 = arith.constant dense<0.000000e+00> : vector<1xf32>
      %63 = vector.multi_reduction <add>, %62, %cst_38 [1, 2] : vector<1x2x2xf32> to vector<1xf32>
      %64 = vector.shape_cast %63 : vector<1xf32> to vector<1x1x1xf32>
      %65 = vector.extract %64[0, 0, 0] : f32 from vector<1x1x1xf32>
      %66 = vector.shape_cast %53 : vector<2x2xf32> to vector<1x2x2xf32>
      %cst_39 = arith.constant dense<0.000000e+00> : vector<1xf32>
      %67 = vector.multi_reduction <add>, %66, %cst_39 [1, 2] : vector<1x2x2xf32> to vector<1xf32>
      %68 = vector.shape_cast %67 : vector<1xf32> to vector<1x1x1xf32>
      %69 = vector.extract %68[0, 0, 0] : f32 from vector<1x1x1xf32>
      %70 = arith.addf %65, %69 : f32
      %71 = vector.shape_cast %61 : vector<2x2xf32> to vector<1x2x2xf32>
      %cst_40 = arith.constant dense<0.000000e+00> : vector<1xf32>
      %72 = vector.multi_reduction <add>, %71, %cst_40 [1, 2] : vector<1x2x2xf32> to vector<1xf32>
      %73 = vector.shape_cast %72 : vector<1xf32> to vector<1x1x1xf32>
      %74 = vector.extract %73[0, 0, 0] : f32 from vector<1x1x1xf32>
      %cst_41 = arith.constant 2.000000e+00 : f32
      %75 = arith.mulf %cst_41, %74 : f32
      %76 = arith.addf %70, %75 : f32
      %cst_42 = arith.constant 1.200000e+01 : f32
      %77 = arith.divf %76, %cst_42 : f32
      %cst_43 = arith.constant 4.000000e+00 : f32
      %78 = arith.divf %77, %cst_43 : f32
      %cst_44 = arith.constant 1.000000e+00 : f32
      %79 = arith.mulf %78, %cst_44 : f32
      %cst_45 = arith.constant -1.000000e+00 : f32
      %80 = arith.divf %cst_45, %79 : f32
      %81 = vector.broadcast %80 : f32 to vector<2x2xf32>
      %82 = arith.mulf %45, %81 : vector<2x2xf32>
      %83 = math.exp %82 : vector<2x2xf32>
      %84 = vector.shape_cast %83 : vector<2x2xf32> to vector<1x2x2xf32>
      %cst_46 = arith.constant dense<0.000000e+00> : vector<1xf32>
      %85 = vector.multi_reduction <add>, %84, %cst_46 [1, 2] : vector<1x2x2xf32> to vector<1xf32>
      %86 = vector.shape_cast %85 : vector<1xf32> to vector<1x1x1xf32>
      %87 = vector.extract %86[0, 0, 0] : f32 from vector<1x1x1xf32>
      %cst_47 = arith.constant 0.000000e+00 : f32
      %88 = arith.addf %cst_47, %87 : f32
      %89 = vector.broadcast %80 : f32 to vector<2x2xf32>
      %90 = arith.mulf %53, %89 : vector<2x2xf32>
      %91 = math.exp %90 : vector<2x2xf32>
      %92 = vector.shape_cast %91 : vector<2x2xf32> to vector<1x2x2xf32>
      %cst_48 = arith.constant dense<0.000000e+00> : vector<1xf32>
      %93 = vector.multi_reduction <add>, %92, %cst_48 [1, 2] : vector<1x2x2xf32> to vector<1xf32>
      %94 = vector.shape_cast %93 : vector<1xf32> to vector<1x1x1xf32>
      %95 = vector.extract %94[0, 0, 0] : f32 from vector<1x1x1xf32>
      %96 = arith.addf %88, %95 : f32
      %97 = vector.broadcast %80 : f32 to vector<2x2xf32>
      %98 = arith.mulf %61, %97 : vector<2x2xf32>
      %99 = math.exp %98 : vector<2x2xf32>
      %100 = vector.shape_cast %99 : vector<2x2xf32> to vector<1x2x2xf32>
      %cst_49 = arith.constant dense<0.000000e+00> : vector<1xf32>
      %101 = vector.multi_reduction <add>, %100, %cst_49 [1, 2] : vector<1x2x2xf32> to vector<1xf32>
      %102 = vector.shape_cast %101 : vector<1xf32> to vector<1x1x1xf32>
      %103 = vector.extract %102[0, 0, 0] : f32 from vector<1x1x1xf32>
      %cst_50 = arith.constant 2.000000e+00 : f32
      %104 = arith.mulf %cst_50, %103 : f32
      %105 = arith.subf %96, %104 : f32
      %cst_51 = arith.constant 2.000000e+00 : f32
      %106 = arith.mulf %78, %cst_51 : f32
      %cst_52 = arith.constant -1.000000e+00 : f32
      %107 = arith.divf %cst_52, %106 : f32
      %108 = vector.broadcast %107 : f32 to vector<2x2xf32>
      %109 = arith.mulf %45, %108 : vector<2x2xf32>
      %110 = math.exp %109 : vector<2x2xf32>
      %111 = vector.shape_cast %110 : vector<2x2xf32> to vector<1x2x2xf32>
      %cst_53 = arith.constant dense<0.000000e+00> : vector<1xf32>
      %112 = vector.multi_reduction <add>, %111, %cst_53 [1, 2] : vector<1x2x2xf32> to vector<1xf32>
      %113 = vector.shape_cast %112 : vector<1xf32> to vector<1x1x1xf32>
      %114 = vector.extract %113[0, 0, 0] : f32 from vector<1x1x1xf32>
      %115 = arith.addf %105, %114 : f32
      %116 = vector.broadcast %107 : f32 to vector<2x2xf32>
      %117 = arith.mulf %53, %116 : vector<2x2xf32>
      %118 = math.exp %117 : vector<2x2xf32>
      %119 = vector.shape_cast %118 : vector<2x2xf32> to vector<1x2x2xf32>
      %cst_54 = arith.constant dense<0.000000e+00> : vector<1xf32>
      %120 = vector.multi_reduction <add>, %119, %cst_54 [1, 2] : vector<1x2x2xf32> to vector<1xf32>
      %121 = vector.shape_cast %120 : vector<1xf32> to vector<1x1x1xf32>
      %122 = vector.extract %121[0, 0, 0] : f32 from vector<1x1x1xf32>
      %123 = arith.addf %115, %122 : f32
      %124 = vector.broadcast %107 : f32 to vector<2x2xf32>
      %125 = arith.mulf %61, %124 : vector<2x2xf32>
      %126 = math.exp %125 : vector<2x2xf32>
      %127 = vector.shape_cast %126 : vector<2x2xf32> to vector<1x2x2xf32>
      %cst_55 = arith.constant dense<0.000000e+00> : vector<1xf32>
      %128 = vector.multi_reduction <add>, %127, %cst_55 [1, 2] : vector<1x2x2xf32> to vector<1xf32>
      %129 = vector.shape_cast %128 : vector<1xf32> to vector<1x1x1xf32>
      %130 = vector.extract %129[0, 0, 0] : f32 from vector<1x1x1xf32>
      %cst_56 = arith.constant 2.000000e+00 : f32
      %131 = arith.mulf %cst_56, %130 : f32
      %132 = arith.subf %123, %131 : f32
      %cst_57 = arith.constant 4.000000e+00 : f32
      %133 = arith.mulf %78, %cst_57 : f32
      %cst_58 = arith.constant -1.000000e+00 : f32
      %134 = arith.divf %cst_58, %133 : f32
      %135 = vector.broadcast %134 : f32 to vector<2x2xf32>
      %136 = arith.mulf %45, %135 : vector<2x2xf32>
      %137 = math.exp %136 : vector<2x2xf32>
      %138 = vector.shape_cast %137 : vector<2x2xf32> to vector<1x2x2xf32>
      %cst_59 = arith.constant dense<0.000000e+00> : vector<1xf32>
      %139 = vector.multi_reduction <add>, %138, %cst_59 [1, 2] : vector<1x2x2xf32> to vector<1xf32>
      %140 = vector.shape_cast %139 : vector<1xf32> to vector<1x1x1xf32>
      %141 = vector.extract %140[0, 0, 0] : f32 from vector<1x1x1xf32>
      %142 = arith.addf %132, %141 : f32
      %143 = vector.broadcast %134 : f32 to vector<2x2xf32>
      %144 = arith.mulf %53, %143 : vector<2x2xf32>
      %145 = math.exp %144 : vector<2x2xf32>
      %146 = vector.shape_cast %145 : vector<2x2xf32> to vector<1x2x2xf32>
      %cst_60 = arith.constant dense<0.000000e+00> : vector<1xf32>
      %147 = vector.multi_reduction <add>, %146, %cst_60 [1, 2] : vector<1x2x2xf32> to vector<1xf32>
      %148 = vector.shape_cast %147 : vector<1xf32> to vector<1x1x1xf32>
      %149 = vector.extract %148[0, 0, 0] : f32 from vector<1x1x1xf32>
      %150 = arith.addf %142, %149 : f32
      %151 = vector.broadcast %134 : f32 to vector<2x2xf32>
      %152 = arith.mulf %61, %151 : vector<2x2xf32>
      %153 = math.exp %152 : vector<2x2xf32>
      %154 = vector.shape_cast %153 : vector<2x2xf32> to vector<1x2x2xf32>
      %cst_61 = arith.constant dense<0.000000e+00> : vector<1xf32>
      %155 = vector.multi_reduction <add>, %154, %cst_61 [1, 2] : vector<1x2x2xf32> to vector<1xf32>
      %156 = vector.shape_cast %155 : vector<1xf32> to vector<1x1x1xf32>
      %157 = vector.extract %156[0, 0, 0] : f32 from vector<1x1x1xf32>
      %cst_62 = arith.constant 2.000000e+00 : f32
      %158 = arith.mulf %cst_62, %157 : f32
      %159 = arith.subf %150, %158 : f32
      %cst_63 = arith.constant 8.000000e+00 : f32
      %160 = arith.mulf %78, %cst_63 : f32
      %cst_64 = arith.constant -1.000000e+00 : f32
      %161 = arith.divf %cst_64, %160 : f32
      %162 = vector.broadcast %161 : f32 to vector<2x2xf32>
      %163 = arith.mulf %45, %162 : vector<2x2xf32>
      %164 = math.exp %163 : vector<2x2xf32>
      %165 = vector.shape_cast %164 : vector<2x2xf32> to vector<1x2x2xf32>
      %cst_65 = arith.constant dense<0.000000e+00> : vector<1xf32>
      %166 = vector.multi_reduction <add>, %165, %cst_65 [1, 2] : vector<1x2x2xf32> to vector<1xf32>
      %167 = vector.shape_cast %166 : vector<1xf32> to vector<1x1x1xf32>
      %168 = vector.extract %167[0, 0, 0] : f32 from vector<1x1x1xf32>
      %169 = arith.addf %159, %168 : f32
      %170 = vector.broadcast %161 : f32 to vector<2x2xf32>
      %171 = arith.mulf %53, %170 : vector<2x2xf32>
      %172 = math.exp %171 : vector<2x2xf32>
      %173 = vector.shape_cast %172 : vector<2x2xf32> to vector<1x2x2xf32>
      %cst_66 = arith.constant dense<0.000000e+00> : vector<1xf32>
      %174 = vector.multi_reduction <add>, %173, %cst_66 [1, 2] : vector<1x2x2xf32> to vector<1xf32>
      %175 = vector.shape_cast %174 : vector<1xf32> to vector<1x1x1xf32>
      %176 = vector.extract %175[0, 0, 0] : f32 from vector<1x1x1xf32>
      %177 = arith.addf %169, %176 : f32
      %178 = vector.broadcast %161 : f32 to vector<2x2xf32>
      %179 = arith.mulf %61, %178 : vector<2x2xf32>
      %180 = math.exp %179 : vector<2x2xf32>
      %181 = vector.shape_cast %180 : vector<2x2xf32> to vector<1x2x2xf32>
      %cst_67 = arith.constant dense<0.000000e+00> : vector<1xf32>
      %182 = vector.multi_reduction <add>, %181, %cst_67 [1, 2] : vector<1x2x2xf32> to vector<1xf32>
      %183 = vector.shape_cast %182 : vector<1xf32> to vector<1x1x1xf32>
      %184 = vector.extract %183[0, 0, 0] : f32 from vector<1x1x1xf32>
      %cst_68 = arith.constant 2.000000e+00 : f32
      %185 = arith.mulf %cst_68, %184 : f32
      %186 = arith.subf %177, %185 : f32
      %cst_69 = arith.constant 1.600000e+01 : f32
      %187 = arith.mulf %78, %cst_69 : f32
      %cst_70 = arith.constant -1.000000e+00 : f32
      %188 = arith.divf %cst_70, %187 : f32
      %189 = vector.broadcast %188 : f32 to vector<2x2xf32>
      %190 = arith.mulf %45, %189 : vector<2x2xf32>
      %191 = math.exp %190 : vector<2x2xf32>
      %192 = vector.shape_cast %191 : vector<2x2xf32> to vector<1x2x2xf32>
      %cst_71 = arith.constant dense<0.000000e+00> : vector<1xf32>
      %193 = vector.multi_reduction <add>, %192, %cst_71 [1, 2] : vector<1x2x2xf32> to vector<1xf32>
      %194 = vector.shape_cast %193 : vector<1xf32> to vector<1x1x1xf32>
      %195 = vector.extract %194[0, 0, 0] : f32 from vector<1x1x1xf32>
      %196 = arith.addf %186, %195 : f32
      %197 = vector.broadcast %188 : f32 to vector<2x2xf32>
      %198 = arith.mulf %53, %197 : vector<2x2xf32>
      %199 = math.exp %198 : vector<2x2xf32>
      %200 = vector.shape_cast %199 : vector<2x2xf32> to vector<1x2x2xf32>
      %cst_72 = arith.constant dense<0.000000e+00> : vector<1xf32>
      %201 = vector.multi_reduction <add>, %200, %cst_72 [1, 2] : vector<1x2x2xf32> to vector<1xf32>
      %202 = vector.shape_cast %201 : vector<1xf32> to vector<1x1x1xf32>
      %203 = vector.extract %202[0, 0, 0] : f32 from vector<1x1x1xf32>
      %204 = arith.addf %196, %203 : f32
      %205 = vector.broadcast %188 : f32 to vector<2x2xf32>
      %206 = arith.mulf %61, %205 : vector<2x2xf32>
      %207 = math.exp %206 : vector<2x2xf32>
      %208 = vector.shape_cast %207 : vector<2x2xf32> to vector<1x2x2xf32>
      %cst_73 = arith.constant dense<0.000000e+00> : vector<1xf32>
      %209 = vector.multi_reduction <add>, %208, %cst_73 [1, 2] : vector<1x2x2xf32> to vector<1xf32>
      %210 = vector.shape_cast %209 : vector<1xf32> to vector<1x1x1xf32>
      %211 = vector.extract %210[0, 0, 0] : f32 from vector<1x1x1xf32>
      %cst_74 = arith.constant 2.000000e+00 : f32
      %212 = arith.mulf %cst_74, %211 : f32
      %213 = arith.subf %204, %212 : f32
      %cst_75 = arith.constant 4.000000e+00 : f32
      %214 = arith.divf %213, %cst_75 : f32
      %215 = vector.broadcast %214 : f32 to vector<1x1xf32>
      %c0_76 = arith.constant 0 : index
      %c0_77 = arith.constant 0 : index
      %216 = vector.load %arg3[%c0_76, %c0_77] : memref<1x1xf32, #tpu.memory_space<vmem>>, vector<1x1xf32>
      tpu.vector_store %arg3[%c0_76, %c0_77], %215 {strides = array<i32>} : memref<1x1xf32, #tpu.memory_space<vmem>>, vector<1x1xf32>,
    } else {
    }
    return
  }
  func.func @transform_0(%arg0: i32) -> (i32, i32) {
    %c0_i32 = arith.constant 0 : i32
    %c0_i32_0 = arith.constant 0 : i32
    return %c0_i32, %arg0 : i32, i32
  }
  func.func @transform_1(%arg0: i32) -> (i32, i32) {
    %c0_i32 = arith.constant 0 : i32
    %c0_i32_0 = arith.constant 0 : i32
    return %c0_i32, %arg0 : i32, i32
  }
  func.func @transform_2(%arg0: i32) -> (i32, i32) {
    %c0_i32 = arith.constant 0 : i32
    %c0_i32_0 = arith.constant 0 : i32
    %c0_i32_1 = arith.constant 0 : i32
    return %c0_i32, %c0_i32_0 : i32, i32
  }
}

</mosaic_0001>

<llo_original>
// kernel: tpu_custom_call.1
$region0: #{tpu_custom_call.1}
  #allocation0 [shape = 'u32[]', space=smem, size = 0x4, offset = 0x4, fixed_abs, tag = 'smem constant byte address 0x4 - core index']
  #allocation1 [shape = 'u32[72,128]{1,0:T(1,128)}', space=vmem, size = 0x9000, scoped, tag = 'internal scratch']
  #allocation2 [shape = 'f32[2,2]{1,0:T(2,128)}', space=vmem, size = 0x400, scoped, tag = 'scratch operand']
  #allocation3 [shape = 'f32[2,2]{1,0:T(2,128)}', space=vmem, size = 0x400, scoped, tag = 'scratch operand']
  #allocation4 [shape = 'f32[2,2]{1,0:T(2,128)}', space=vmem, size = 0x400, scoped, tag = 'scratch operand']
  %s0 = inlined_call_operand.hbm [shape: f32[2,1024], index: 0, kind: input, shape index: {}]
  %s1 = inlined_call_operand.hbm [shape: f32[2,1024], index: 1, kind: input, shape index: {}]
  %s2 = inlined_call_operand.hbm [shape: f32[1,1], index: 2, kind: output, shape index: {}]
  %s3 = sld [smem:[#allocation0]]
  $region34: #{tpu_custom_call.1} parent=0
    _
  %s5 = ssub.s32 1, %s3
  %s6 = scalar_select 0, %s5, %s3
  $region1: #{tpu_custom_call.1} parent=0
    #allocation5 [shape = 'u8[8192]{0}', space=vmem, size = 0x2000, scoped, tag = 'input window, operand 0, single buffered']
    #allocation6 [shape = 's32[1]{0}', space=sflag, size = 0x4, scoped, tag = 'scoped memory for tpu_custom_call.1']
    #allocation7 [shape = 's32[1]{0}', space=sflag, size = 0x4, scoped, tag = 'scoped memory for tpu_custom_call.1']
    #allocation8 [shape = 'u8[8192]{0}', space=vmem, size = 0x2000, scoped, tag = 'input window, operand 1, single buffered']
    #allocation9 [shape = 's32[1]{0}', space=sflag, size = 0x4, scoped, tag = 'scoped memory for tpu_custom_call.1']
    #allocation10 [shape = 'u8[512]{0}', space=vmem, size = 0x400, scoped, tag = 'output window, operand 0, single buffered']
    %7 = vsyncpa [#allocation6], 0
    %8 = vsyncpa [#allocation9], 0
    %9 = vsyncpa [#allocation7], 0
    // Predicated region
    $region2: #{tpu_custom_call.1} parent=1 // pred_check
      _
    $region3: #{tpu_custom_call.1} parent=1 // pred_check_branch
      %11 = sbr.rel (0) target = $region5
    $region4: #{tpu_custom_call.1} parent=1 // pred_region
      %13 = vsyncadd [#allocation6], 0
      %s15 = sshll.u32 %s0, 4
      %s16 = int_to_ptr.hbm [resolvable:$true] %s15
      %s17 = sshll.u32 [#allocation5], 4
      %s18 = int_to_ptr.vmem [resolvable:$true] %s17
      %20 = dma.hbm_to_vmem [thread:$0]  %s16, 256, %s18, [#allocation6]
    $region5: #{tpu_custom_call.1} parent=1 // pred_fallthru
      _
    // Predicated region
    $region6: #{tpu_custom_call.1} parent=1 // pred_check
      _
    $region7: #{tpu_custom_call.1} parent=1 // pred_check_branch
      %22 = sbr.rel (0) target = $region9
    $region8: #{tpu_custom_call.1} parent=1 // pred_region
      %24 = vsyncadd [#allocation9], 0
      %s26 = sshll.u32 %s1, 4
      %s27 = int_to_ptr.hbm [resolvable:$true] %s26
      %s28 = sshll.u32 [#allocation8], 4
      %s29 = int_to_ptr.vmem [resolvable:$true] %s28
      %31 = dma.hbm_to_vmem [thread:$0]  %s27, 256, %s29, [#allocation9]
    $region9: #{tpu_custom_call.1} parent=1 // pred_fallthru
      _
    // Predicated region
    $region10: #{tpu_custom_call.1} parent=1 // pred_check
      _
    $region11: #{tpu_custom_call.1} parent=1 // pred_check_branch
      %33 = sbr.rel (0) target = $region13
    $region12: #{tpu_custom_call.1} parent=1 // pred_region
      %35 = dma.done [#allocation6], 256
    $region13: #{tpu_custom_call.1} parent=1 // pred_fallthru
      _
    // Predicated region
    $region14: #{tpu_custom_call.1} parent=1 // pred_check
      _
    $region15: #{tpu_custom_call.1} parent=1 // pred_check_branch
      %37 = sbr.rel (0) target = $region17
    $region16: #{tpu_custom_call.1} parent=1 // pred_region
      %39 = dma.done [#allocation9], 256
    $region17: #{tpu_custom_call.1} parent=1 // pred_fallthru
      _
    %p40 = scmp.eq.s32.totalorder 0, 0
    // Predicated region
    $region18: #{tpu_custom_call.1} parent=1 // pred_check
      %p41 = pneg %p40
    $region19: #{tpu_custom_call.1} parent=1 // pred_check_branch
      %43 = sbr.rel (%p41) target = $region21
    $region20: #{tpu_custom_call.1} parent=1 // pred_region
      %vm44 = vcmask 9216
      %45 = vst.msk [vmem:[#allocation2] sm:$0x3] %vm44, 0.0
      %46 = vst.msk [vmem:[#allocation3] sm:$0x3] %vm44, 0.0
      %47 = vst.msk [vmem:[#allocation4] sm:$0x3] %vm44, 0.0
    $region21: #{tpu_custom_call.1} parent=1 // pred_fallthru
      _
    %v48 = vld [vmem:[#allocation5] sm:$0xff]
    %v49 = vld [vmem:[#allocation5 + $0x8] sm:$0xff]
    %v50 = vld [vmem:[#allocation8] sm:$0xff]
    %v51 = vld [vmem:[#allocation8 + $0x8] sm:$0xff]
    %v52 = vld [vmem:[#allocation2] sm:$0x3]
    %55 = vst [vmem:[#allocation1] ss:$4 sm:$0xff] %v48
    %s56 = scalar_lea.vmem [#allocation1], 32
    %57 = vst [vmem:[%s56] ss:$4 sm:$0xff] %v49
    %v58 = vld.sshfl [vmem:[#allocation1] sm:$0xff pattern:$0x73625140]
    %v59 = vld.sshfl [vmem:[#allocation1 + $0x8] sm:$0xff pattern:$0x73625140]
    %v60 = vld.sshfl [vmem:[#allocation1 + $0x10] sm:$0xff pattern:$0x73625140]
    %v61 = vld.sshfl [vmem:[#allocation1 + $0x18] sm:$0xff pattern:$0x73625140]
    %v62 = vld.sshfl [vmem:[#allocation1 + $0x20] sm:$0xff pattern:$0x73625140]
    %v63 = vld.sshfl [vmem:[#allocation1 + $0x28] sm:$0xff pattern:$0x73625140]
    %v64 = vld.sshfl [vmem:[#allocation1 + $0x30] sm:$0xff pattern:$0x73625140]
    %v65 = vld.sshfl [vmem:[#allocation1 + $0x38] sm:$0xff pattern:$0x73625140]
    %74 = vst [vmem:[#allocation1] ss:$4 sm:$0xff] %v48
    %s75 = scalar_lea.vmem [#allocation1], 32
    %76 = vst [vmem:[%s75] ss:$4 sm:$0xff] %v49
    %v77 = vld.sshfl [vmem:[#allocation1] sm:$0xff pattern:$0x73625140]
    %v78 = vld.sshfl [vmem:[#allocation1 + $0x8] sm:$0xff pattern:$0x73625140]
    %v79 = vld.sshfl [vmem:[#allocation1 + $0x10] sm:$0xff pattern:$0x73625140]
    %v80 = vld.sshfl [vmem:[#allocation1 + $0x18] sm:$0xff pattern:$0x73625140]
    %v81 = vld.sshfl [vmem:[#allocation1 + $0x20] sm:$0xff pattern:$0x73625140]
    %v82 = vld.sshfl [vmem:[#allocation1 + $0x28] sm:$0xff pattern:$0x73625140]
    %v83 = vld.sshfl [vmem:[#allocation1 + $0x30] sm:$0xff pattern:$0x73625140]
    %v84 = vld.sshfl [vmem:[#allocation1 + $0x38] sm:$0xff pattern:$0x73625140]
    %93 = vmatpush.xpose.msra.mxu0 0.0
    %94 = vmatpush.xpose.msra.mxu0 0.0
    %95 = vmatpush.xpose.msra.mxu0 0.0
    %96 = vmatpush.xpose.msra.mxu0 0.0
    %97 = vmatpush.xpose.msra.mxu0 0.0
    %98 = vmatpush.xpose.msra.mxu0 0.0
    %99 = vmatpush.xpose.msra.mxu0 0.0
    %100 = vmatpush.xpose.msra.mxu0 0.0
    %101 = vmatpush.xpose.msra.mxu0 0.0
    %102 = vmatpush.xpose.msra.mxu0 0.0
    %103 = vmatpush.xpose.msra.mxu0 0.0
    %104 = vmatpush.xpose.msra.mxu0 0.0
    %105 = vmatpush.xpose.msra.mxu0 0.0
    %106 = vmatpush.xpose.msra.mxu0 0.0
    %107 = vmatpush.xpose.msra.mxu0 0.0
    %108 = vmatpush.xpose.msra.mxu0 %v77
    %109 = vmatmul.f32.gmra.mxu0 %v58
    %v110 = vpop.f32.mrf.mxu0
    %v111 = vadd.f32 0.0, %v110
    %112 = vdwg.mxu0
    %113 = vmatpush.xpose.msra.mxu0 0.0
    %114 = vmatpush.xpose.msra.mxu0 0.0
    %115 = vmatpush.xpose.msra.mxu0 0.0
    %116 = vmatpush.xpose.msra.mxu0 0.0
    %117 = vmatpush.xpose.msra.mxu0 0.0
    %118 = vmatpush.xpose.msra.mxu0 0.0
    %119 = vmatpush.xpose.msra.mxu0 0.0
    %120 = vmatpush.xpose.msra.mxu0 0.0
    %121 = vmatpush.xpose.msra.mxu0 0.0
    %122 = vmatpush.xpose.msra.mxu0 0.0
    %123 = vmatpush.xpose.msra.mxu0 0.0
    %124 = vmatpush.xpose.msra.mxu0 0.0
    %125 = vmatpush.xpose.msra.mxu0 0.0
    %126 = vmatpush.xpose.msra.mxu0 0.0
    %127 = vmatpush.xpose.msra.mxu0 0.0
    %128 = vmatpush.xpose.msra.mxu0 %v78
    %129 = vmatmul.f32.gmra.mxu0 %v59
    %v130 = vpop.f32.mrf.mxu0
    %v131 = vadd.f32 %v111, %v130
    %132 = vdwg.mxu0
    %133 = vmatpush.xpose.msra.mxu0 0.0
    %134 = vmatpush.xpose.msra.mxu0 0.0
    %135 = vmatpush.xpose.msra.mxu0 0.0
    %136 = vmatpush.xpose.msra.mxu0 0.0
    %137 = vmatpush.xpose.msra.mxu0 0.0
    %138 = vmatpush.xpose.msra.mxu0 0.0
    %139 = vmatpush.xpose.msra.mxu0 0.0
    %140 = vmatpush.xpose.msra.mxu0 0.0
    %141 = vmatpush.xpose.msra.mxu0 0.0
    %142 = vmatpush.xpose.msra.mxu0 0.0
    %143 = vmatpush.xpose.msra.mxu0 0.0
    %144 = vmatpush.xpose.msra.mxu0 0.0
    %145 = vmatpush.xpose.msra.mxu0 0.0
    %146 = vmatpush.xpose.msra.mxu0 0.0
    %147 = vmatpush.xpose.msra.mxu0 0.0
    %148 = vmatpush.xpose.msra.mxu0 %v79
    %149 = vmatmul.f32.gmra.mxu0 %v60
    %v150 = vpop.f32.mrf.mxu0
    %v151 = vadd.f32 %v131, %v150
    %152 = vdwg.mxu0
    %153 = vmatpush.xpose.msra.mxu0 0.0
    %154 = vmatpush.xpose.msra.mxu0 0.0
    %155 = vmatpush.xpose.msra.mxu0 0.0
    %156 = vmatpush.xpose.msra.mxu0 0.0
    %157 = vmatpush.xpose.msra.mxu0 0.0
    %158 = vmatpush.xpose.msra.mxu0 0.0
    %159 = vmatpush.xpose.msra.mxu0 0.0
    %160 = vmatpush.xpose.msra.mxu0 0.0
    %161 = vmatpush.xpose.msra.mxu0 0.0
    %162 = vmatpush.xpose.msra.mxu0 0.0
    %163 = vmatpush.xpose.msra.mxu0 0.0
    %164 = vmatpush.xpose.msra.mxu0 0.0
    %165 = vmatpush.xpose.msra.mxu0 0.0
    %166 = vmatpush.xpose.msra.mxu0 0.0
    %167 = vmatpush.xpose.msra.mxu0 0.0
    %168 = vmatpush.xpose.msra.mxu0 %v80
    %169 = vmatmul.f32.gmra.mxu0 %v61
    %v170 = vpop.f32.mrf.mxu0
    %v171 = vadd.f32 %v151, %v170
    %172 = vdwg.mxu0
    %173 = vmatpush.xpose.msra.mxu0 0.0
    %174 = vmatpush.xpose.msra.mxu0 0.0
    %175 = vmatpush.xpose.msra.mxu0 0.0
    %176 = vmatpush.xpose.msra.mxu0 0.0
    %177 = vmatpush.xpose.msra.mxu0 0.0
    %178 = vmatpush.xpose.msra.mxu0 0.0
    %179 = vmatpush.xpose.msra.mxu0 0.0
    %180 = vmatpush.xpose.msra.mxu0 0.0
    %181 = vmatpush.xpose.msra.mxu0 0.0
    %182 = vmatpush.xpose.msra.mxu0 0.0
    %183 = vmatpush.xpose.msra.mxu0 0.0
    %184 = vmatpush.xpose.msra.mxu0 0.0
    %185 = vmatpush.xpose.msra.mxu0 0.0
    %186 = vmatpush.xpose.msra.mxu0 0.0
    %187 = vmatpush.xpose.msra.mxu0 0.0
    %188 = vmatpush.xpose.msra.mxu0 %v81
    %189 = vmatmul.f32.gmra.mxu0 %v62
    %v190 = vpop.f32.mrf.mxu0
    %v191 = vadd.f32 %v171, %v190
    %192 = vdwg.mxu0
    %193 = vmatpush.xpose.msra.mxu0 0.0
    %194 = vmatpush.xpose.msra.mxu0 0.0
    %195 = vmatpush.xpose.msra.mxu0 0.0
    %196 = vmatpush.xpose.msra.mxu0 0.0
    %197 = vmatpush.xpose.msra.mxu0 0.0
    %198 = vmatpush.xpose.msra.mxu0 0.0
    %199 = vmatpush.xpose.msra.mxu0 0.0
    %200 = vmatpush.xpose.msra.mxu0 0.0
    %201 = vmatpush.xpose.msra.mxu0 0.0
    %202 = vmatpush.xpose.msra.mxu0 0.0
    %203 = vmatpush.xpose.msra.mxu0 0.0
    %204 = vmatpush.xpose.msra.mxu0 0.0
    %205 = vmatpush.xpose.msra.mxu0 0.0
    %206 = vmatpush.xpose.msra.mxu0 0.0
    %207 = vmatpush.xpose.msra.mxu0 0.0
    %208 = vmatpush.xpose.msra.mxu0 %v82
    %209 = vmatmul.f32.gmra.mxu0 %v63
    %v210 = vpop.f32.mrf.mxu0
    %v211 = vadd.f32 %v191, %v210
    %212 = vdwg.mxu0
    %213 = vmatpush.xpose.msra.mxu0 0.0
    %214 = vmatpush.xpose.msra.mxu0 0.0
    %215 = vmatpush.xpose.msra.mxu0 0.0
    %216 = vmatpush.xpose.msra.mxu0 0.0
    %217 = vmatpush.xpose.msra.mxu0 0.0
    %218 = vmatpush.xpose.msra.mxu0 0.0
    %219 = vmatpush.xpose.msra.mxu0 0.0
    %220 = vmatpush.xpose.msra.mxu0 0.0
    %221 = vmatpush.xpose.msra.mxu0 0.0
    %222 = vmatpush.xpose.msra.mxu0 0.0
    %223 = vmatpush.xpose.msra.mxu0 0.0
    %224 = vmatpush.xpose.msra.mxu0 0.0
    %225 = vmatpush.xpose.msra.mxu0 0.0
    %226 = vmatpush.xpose.msra.mxu0 0.0
    %227 = vmatpush.xpose.msra.mxu0 0.0
    %228 = vmatpush.xpose.msra.mxu0 %v83
    %229 = vmatmul.f32.gmra.mxu0 %v64
    %v230 = vpop.f32.mrf.mxu0
    %v231 = vadd.f32 %v211, %v230
    %232 = vdwg.mxu0
    %233 = vmatpush.xpose.msra.mxu0 0.0
    %234 = vmatpush.xpose.msra.mxu0 0.0
    %235 = vmatpush.xpose.msra.mxu0 0.0
    %236 = vmatpush.xpose.msra.mxu0 0.0
    %237 = vmatpush.xpose.msra.mxu0 0.0
    %238 = vmatpush.xpose.msra.mxu0 0.0
    %239 = vmatpush.xpose.msra.mxu0 0.0
    %240 = vmatpush.xpose.msra.mxu0 0.0
    %241 = vmatpush.xpose.msra.mxu0 0.0
    %242 = vmatpush.xpose.msra.mxu0 0.0
    %243 = vmatpush.xpose.msra.mxu0 0.0
    %244 = vmatpush.xpose.msra.mxu0 0.0
    %245 = vmatpush.xpose.msra.mxu0 0.0
    %246 = vmatpush.xpose.msra.mxu0 0.0
    %247 = vmatpush.xpose.msra.mxu0 0.0
    %248 = vmatpush.xpose.msra.mxu0 %v84
    %249 = vmatmul.f32.gmra.mxu0 %v65
    %v250 = vpop.f32.mrf.mxu0
    %v251 = vadd.f32 %v231, %v250
    %252 = vdwg.mxu0
    %v253 = vadd.f32 %v52, %v251
    %vm254 = vcmask 9216
    %255 = vst.msk [vmem:[#allocation2] sm:$0x3] %vm254, %v253
    %v256 = vld [vmem:[#allocation3] sm:$0x3]
    %257 = vst [vmem:[#allocation1] ss:$4 sm:$0xff] %v48
    %s258 = scalar_lea.vmem [#allocation1], 32
    %259 = vst [vmem:[%s258] ss:$4 sm:$0xff] %v49
    %v260 = vld.sshfl [vmem:[#allocation1] sm:$0xff pattern:$0x73625140]
    %v261 = vld.sshfl [vmem:[#allocation1 + $0x8] sm:$0xff pattern:$0x73625140]
    %v262 = vld.sshfl [vmem:[#allocation1 + $0x10] sm:$0xff pattern:$0x73625140]
    %v263 = vld.sshfl [vmem:[#allocation1 + $0x18] sm:$0xff pattern:$0x73625140]
    %v264 = vld.sshfl [vmem:[#allocation1 + $0x20] sm:$0xff pattern:$0x73625140]
    %v265 = vld.sshfl [vmem:[#allocation1 + $0x28] sm:$0xff pattern:$0x73625140]
    %v266 = vld.sshfl [vmem:[#allocation1 + $0x30] sm:$0xff pattern:$0x73625140]
    %v267 = vld.sshfl [vmem:[#allocation1 + $0x38] sm:$0xff pattern:$0x73625140]
    %278 = vst [vmem:[#allocation1] ss:$4 sm:$0xff] %v50
    %s279 = scalar_lea.vmem [#allocation1], 32
    %280 = vst [vmem:[%s279] ss:$4 sm:$0xff] %v51
    %v281 = vld.sshfl [vmem:[#allocation1] sm:$0xff pattern:$0x73625140]
    %v282 = vld.sshfl [vmem:[#allocation1 + $0x8] sm:$0xff pattern:$0x73625140]
    %v283 = vld.sshfl [vmem:[#allocation1 + $0x10] sm:$0xff pattern:$0x73625140]
    %v284 = vld.sshfl [vmem:[#allocation1 + $0x18] sm:$0xff pattern:$0x73625140]
    %v285 = vld.sshfl [vmem:[#allocation1 + $0x20] sm:$0xff pattern:$0x73625140]
    %v286 = vld.sshfl [vmem:[#allocation1 + $0x28] sm:$0xff pattern:$0x73625140]
    %v287 = vld.sshfl [vmem:[#allocation1 + $0x30] sm:$0xff pattern:$0x73625140]
    %v288 = vld.sshfl [vmem:[#allocation1 + $0x38] sm:$0xff pattern:$0x73625140]
    %297 = vmatpush.xpose.msra.mxu0 0.0
    %298 = vmatpush.xpose.msra.mxu0 0.0
    %299 = vmatpush.xpose.msra.mxu0 0.0
    %300 = vmatpush.xpose.msra.mxu0 0.0
    %301 = vmatpush.xpose.msra.mxu0 0.0
    %302 = vmatpush.xpose.msra.mxu0 0.0
    %303 = vmatpush.xpose.msra.mxu0 0.0
    %304 = vmatpush.xpose.msra.mxu0 0.0
    %305 = vmatpush.xpose.msra.mxu0 0.0
    %306 = vmatpush.xpose.msra.mxu0 0.0
    %307 = vmatpush.xpose.msra.mxu0 0.0
    %308 = vmatpush.xpose.msra.mxu0 0.0
    %309 = vmatpush.xpose.msra.mxu0 0.0
    %310 = vmatpush.xpose.msra.mxu0 0.0
    %311 = vmatpush.xpose.msra.mxu0 0.0
    %312 = vmatpush.xpose.msra.mxu0 %v281
    %313 = vmatmul.f32.gmra.mxu0 %v260
    %v314 = vpop.f32.mrf.mxu0
    %v315 = vadd.f32 0.0, %v314
    %316 = vdwg.mxu0
    %317 = vmatpush.xpose.msra.mxu0 0.0
    %318 = vmatpush.xpose.msra.mxu0 0.0
    %319 = vmatpush.xpose.msra.mxu0 0.0
    %320 = vmatpush.xpose.msra.mxu0 0.0
    %321 = vmatpush.xpose.msra.mxu0 0.0
    %322 = vmatpush.xpose.msra.mxu0 0.0
    %323 = vmatpush.xpose.msra.mxu0 0.0
    %324 = vmatpush.xpose.msra.mxu0 0.0
    %325 = vmatpush.xpose.msra.mxu0 0.0
    %326 = vmatpush.xpose.msra.mxu0 0.0
    %327 = vmatpush.xpose.msra.mxu0 0.0
    %328 = vmatpush.xpose.msra.mxu0 0.0
    %329 = vmatpush.xpose.msra.mxu0 0.0
    %330 = vmatpush.xpose.msra.mxu0 0.0
    %331 = vmatpush.xpose.msra.mxu0 0.0
    %332 = vmatpush.xpose.msra.mxu0 %v282
    %333 = vmatmul.f32.gmra.mxu0 %v261
    %v334 = vpop.f32.mrf.mxu0
    %v335 = vadd.f32 %v315, %v334
    %336 = vdwg.mxu0
    %337 = vmatpush.xpose.msra.mxu0 0.0
    %338 = vmatpush.xpose.msra.mxu0 0.0
    %339 = vmatpush.xpose.msra.mxu0 0.0
    %340 = vmatpush.xpose.msra.mxu0 0.0
    %341 = vmatpush.xpose.msra.mxu0 0.0
    %342 = vmatpush.xpose.msra.mxu0 0.0
    %343 = vmatpush.xpose.msra.mxu0 0.0
    %344 = vmatpush.xpose.msra.mxu0 0.0
    %345 = vmatpush.xpose.msra.mxu0 0.0
    %346 = vmatpush.xpose.msra.mxu0 0.0
    %347 = vmatpush.xpose.msra.mxu0 0.0
    %348 = vmatpush.xpose.msra.mxu0 0.0
    %349 = vmatpush.xpose.msra.mxu0 0.0
    %350 = vmatpush.xpose.msra.mxu0 0.0
    %351 = vmatpush.xpose.msra.mxu0 0.0
    %352 = vmatpush.xpose.msra.mxu0 %v283
    %353 = vmatmul.f32.gmra.mxu0 %v262
    %v354 = vpop.f32.mrf.mxu0
    %v355 = vadd.f32 %v335, %v354
    %356 = vdwg.mxu0
    %357 = vmatpush.xpose.msra.mxu0 0.0
    %358 = vmatpush.xpose.msra.mxu0 0.0
    %359 = vmatpush.xpose.msra.mxu0 0.0
    %360 = vmatpush.xpose.msra.mxu0 0.0
    %361 = vmatpush.xpose.msra.mxu0 0.0
    %362 = vmatpush.xpose.msra.mxu0 0.0
    %363 = vmatpush.xpose.msra.mxu0 0.0
    %364 = vmatpush.xpose.msra.mxu0 0.0
    %365 = vmatpush.xpose.msra.mxu0 0.0
    %366 = vmatpush.xpose.msra.mxu0 0.0
    %367 = vmatpush.xpose.msra.mxu0 0.0
    %368 = vmatpush.xpose.msra.mxu0 0.0
    %369 = vmatpush.xpose.msra.mxu0 0.0
    %370 = vmatpush.xpose.msra.mxu0 0.0
    %371 = vmatpush.xpose.msra.mxu0 0.0
    %372 = vmatpush.xpose.msra.mxu0 %v284
    %373 = vmatmul.f32.gmra.mxu0 %v263
    %v374 = vpop.f32.mrf.mxu0
    %v375 = vadd.f32 %v355, %v374
    %376 = vdwg.mxu0
    %377 = vmatpush.xpose.msra.mxu0 0.0
    %378 = vmatpush.xpose.msra.mxu0 0.0
    %379 = vmatpush.xpose.msra.mxu0 0.0
    %380 = vmatpush.xpose.msra.mxu0 0.0
    %381 = vmatpush.xpose.msra.mxu0 0.0
    %382 = vmatpush.xpose.msra.mxu0 0.0
    %383 = vmatpush.xpose.msra.mxu0 0.0
    %384 = vmatpush.xpose.msra.mxu0 0.0
    %385 = vmatpush.xpose.msra.mxu0 0.0
    %386 = vmatpush.xpose.msra.mxu0 0.0
    %387 = vmatpush.xpose.msra.mxu0 0.0
    %388 = vmatpush.xpose.msra.mxu0 0.0
    %389 = vmatpush.xpose.msra.mxu0 0.0
    %390 = vmatpush.xpose.msra.mxu0 0.0
    %391 = vmatpush.xpose.msra.mxu0 0.0
    %392 = vmatpush.xpose.msra.mxu0 %v285
    %393 = vmatmul.f32.gmra.mxu0 %v264
    %v394 = vpop.f32.mrf.mxu0
    %v395 = vadd.f32 %v375, %v394
    %396 = vdwg.mxu0
    %397 = vmatpush.xpose.msra.mxu0 0.0
    %398 = vmatpush.xpose.msra.mxu0 0.0
    %399 = vmatpush.xpose.msra.mxu0 0.0
    %400 = vmatpush.xpose.msra.mxu0 0.0
    %401 = vmatpush.xpose.msra.mxu0 0.0
    %402 = vmatpush.xpose.msra.mxu0 0.0
    %403 = vmatpush.xpose.msra.mxu0 0.0
    %404 = vmatpush.xpose.msra.mxu0 0.0
    %405 = vmatpush.xpose.msra.mxu0 0.0
    %406 = vmatpush.xpose.msra.mxu0 0.0
    %407 = vmatpush.xpose.msra.mxu0 0.0
    %408 = vmatpush.xpose.msra.mxu0 0.0
    %409 = vmatpush.xpose.msra.mxu0 0.0
    %410 = vmatpush.xpose.msra.mxu0 0.0
    %411 = vmatpush.xpose.msra.mxu0 0.0
    %412 = vmatpush.xpose.msra.mxu0 %v286
    %413 = vmatmul.f32.gmra.mxu0 %v265
    %v414 = vpop.f32.mrf.mxu0
    %v415 = vadd.f32 %v395, %v414
    %416 = vdwg.mxu0
    %417 = vmatpush.xpose.msra.mxu0 0.0
    %418 = vmatpush.xpose.msra.mxu0 0.0
    %419 = vmatpush.xpose.msra.mxu0 0.0
    %420 = vmatpush.xpose.msra.mxu0 0.0
    %421 = vmatpush.xpose.msra.mxu0 0.0
    %422 = vmatpush.xpose.msra.mxu0 0.0
    %423 = vmatpush.xpose.msra.mxu0 0.0
    %424 = vmatpush.xpose.msra.mxu0 0.0
    %425 = vmatpush.xpose.msra.mxu0 0.0
    %426 = vmatpush.xpose.msra.mxu0 0.0
    %427 = vmatpush.xpose.msra.mxu0 0.0
    %428 = vmatpush.xpose.msra.mxu0 0.0
    %429 = vmatpush.xpose.msra.mxu0 0.0
    %430 = vmatpush.xpose.msra.mxu0 0.0
    %431 = vmatpush.xpose.msra.mxu0 0.0
    %432 = vmatpush.xpose.msra.mxu0 %v287
    %433 = vmatmul.f32.gmra.mxu0 %v266
    %v434 = vpop.f32.mrf.mxu0
    %v435 = vadd.f32 %v415, %v434
    %436 = vdwg.mxu0
    %437 = vmatpush.xpose.msra.mxu0 0.0
    %438 = vmatpush.xpose.msra.mxu0 0.0
    %439 = vmatpush.xpose.msra.mxu0 0.0
    %440 = vmatpush.xpose.msra.mxu0 0.0
    %441 = vmatpush.xpose.msra.mxu0 0.0
    %442 = vmatpush.xpose.msra.mxu0 0.0
    %443 = vmatpush.xpose.msra.mxu0 0.0
    %444 = vmatpush.xpose.msra.mxu0 0.0
    %445 = vmatpush.xpose.msra.mxu0 0.0
    %446 = vmatpush.xpose.msra.mxu0 0.0
    %447 = vmatpush.xpose.msra.mxu0 0.0
    %448 = vmatpush.xpose.msra.mxu0 0.0
    %449 = vmatpush.xpose.msra.mxu0 0.0
    %450 = vmatpush.xpose.msra.mxu0 0.0
    %451 = vmatpush.xpose.msra.mxu0 0.0
    %452 = vmatpush.xpose.msra.mxu0 %v288
    %453 = vmatmul.f32.gmra.mxu0 %v267
    %v454 = vpop.f32.mrf.mxu0
    %v455 = vadd.f32 %v435, %v454
    %456 = vdwg.mxu0
    %v457 = vadd.f32 %v256, %v455
    %458 = vst.msk [vmem:[#allocation3] sm:$0x3] %vm254, %v457
    %v459 = vld [vmem:[#allocation4] sm:$0x3]
    %460 = vst [vmem:[#allocation1] ss:$4 sm:$0xff] %v50
    %s461 = scalar_lea.vmem [#allocation1], 32
    %462 = vst [vmem:[%s461] ss:$4 sm:$0xff] %v51
    %v463 = vld.sshfl [vmem:[#allocation1] sm:$0xff pattern:$0x73625140]
    %v464 = vld.sshfl [vmem:[#allocation1 + $0x8] sm:$0xff pattern:$0x73625140]
    %v465 = vld.sshfl [vmem:[#allocation1 + $0x10] sm:$0xff pattern:$0x73625140]
    %v466 = vld.sshfl [vmem:[#allocation1 + $0x18] sm:$0xff pattern:$0x73625140]
    %v467 = vld.sshfl [vmem:[#allocation1 + $0x20] sm:$0xff pattern:$0x73625140]
    %v468 = vld.sshfl [vmem:[#allocation1 + $0x28] sm:$0xff pattern:$0x73625140]
    %v469 = vld.sshfl [vmem:[#allocation1 + $0x30] sm:$0xff pattern:$0x73625140]
    %v470 = vld.sshfl [vmem:[#allocation1 + $0x38] sm:$0xff pattern:$0x73625140]
    %479 = vst [vmem:[#allocation1] ss:$4 sm:$0xff] %v50
    %s480 = scalar_lea.vmem [#allocation1], 32
    %481 = vst [vmem:[%s480] ss:$4 sm:$0xff] %v51
    %v482 = vld.sshfl [vmem:[#allocation1] sm:$0xff pattern:$0x73625140]
    %v483 = vld.sshfl [vmem:[#allocation1 + $0x8] sm:$0xff pattern:$0x73625140]
    %v484 = vld.sshfl [vmem:[#allocation1 + $0x10] sm:$0xff pattern:$0x73625140]
    %v485 = vld.sshfl [vmem:[#allocation1 + $0x18] sm:$0xff pattern:$0x73625140]
    %v486 = vld.sshfl [vmem:[#allocation1 + $0x20] sm:$0xff pattern:$0x73625140]
    %v487 = vld.sshfl [vmem:[#allocation1 + $0x28] sm:$0xff pattern:$0x73625140]
    %v488 = vld.sshfl [vmem:[#allocation1 + $0x30] sm:$0xff pattern:$0x73625140]
    %v489 = vld.sshfl [vmem:[#allocation1 + $0x38] sm:$0xff pattern:$0x73625140]
    %498 = vmatpush.xpose.msra.mxu0 0.0
    %499 = vmatpush.xpose.msra.mxu0 0.0
    %500 = vmatpush.xpose.msra.mxu0 0.0
    %501 = vmatpush.xpose.msra.mxu0 0.0
    %502 = vmatpush.xpose.msra.mxu0 0.0
    %503 = vmatpush.xpose.msra.mxu0 0.0
    %504 = vmatpush.xpose.msra.mxu0 0.0
    %505 = vmatpush.xpose.msra.mxu0 0.0
    %506 = vmatpush.xpose.msra.mxu0 0.0
    %507 = vmatpush.xpose.msra.mxu0 0.0
    %508 = vmatpush.xpose.msra.mxu0 0.0
    %509 = vmatpush.xpose.msra.mxu0 0.0
    %510 = vmatpush.xpose.msra.mxu0 0.0
    %511 = vmatpush.xpose.msra.mxu0 0.0
    %512 = vmatpush.xpose.msra.mxu0 0.0
    %513 = vmatpush.xpose.msra.mxu0 %v482
    %514 = vmatmul.f32.gmra.mxu0 %v463
    %v515 = vpop.f32.mrf.mxu0
    %v516 = vadd.f32 0.0, %v515
    %517 = vdwg.mxu0
    %518 = vmatpush.xpose.msra.mxu0 0.0
    %519 = vmatpush.xpose.msra.mxu0 0.0
    %520 = vmatpush.xpose.msra.mxu0 0.0
    %521 = vmatpush.xpose.msra.mxu0 0.0
    %522 = vmatpush.xpose.msra.mxu0 0.0
    %523 = vmatpush.xpose.msra.mxu0 0.0
    %524 = vmatpush.xpose.msra.mxu0 0.0
    %525 = vmatpush.xpose.msra.mxu0 0.0
    %526 = vmatpush.xpose.msra.mxu0 0.0
    %527 = vmatpush.xpose.msra.mxu0 0.0
    %528 = vmatpush.xpose.msra.mxu0 0.0
    %529 = vmatpush.xpose.msra.mxu0 0.0
    %530 = vmatpush.xpose.msra.mxu0 0.0
    %531 = vmatpush.xpose.msra.mxu0 0.0
    %532 = vmatpush.xpose.msra.mxu0 0.0
    %533 = vmatpush.xpose.msra.mxu0 %v483
    %534 = vmatmul.f32.gmra.mxu0 %v464
    %v535 = vpop.f32.mrf.mxu0
    %v536 = vadd.f32 %v516, %v535
    %537 = vdwg.mxu0
    %538 = vmatpush.xpose.msra.mxu0 0.0
    %539 = vmatpush.xpose.msra.mxu0 0.0
    %540 = vmatpush.xpose.msra.mxu0 0.0
    %541 = vmatpush.xpose.msra.mxu0 0.0
    %542 = vmatpush.xpose.msra.mxu0 0.0
    %543 = vmatpush.xpose.msra.mxu0 0.0
    %544 = vmatpush.xpose.msra.mxu0 0.0
    %545 = vmatpush.xpose.msra.mxu0 0.0
    %546 = vmatpush.xpose.msra.mxu0 0.0
    %547 = vmatpush.xpose.msra.mxu0 0.0
    %548 = vmatpush.xpose.msra.mxu0 0.0
    %549 = vmatpush.xpose.msra.mxu0 0.0
    %550 = vmatpush.xpose.msra.mxu0 0.0
    %551 = vmatpush.xpose.msra.mxu0 0.0
    %552 = vmatpush.xpose.msra.mxu0 0.0
    %553 = vmatpush.xpose.msra.mxu0 %v484
    %554 = vmatmul.f32.gmra.mxu0 %v465
    %v555 = vpop.f32.mrf.mxu0
    %v556 = vadd.f32 %v536, %v555
    %557 = vdwg.mxu0
    %558 = vmatpush.xpose.msra.mxu0 0.0
    %559 = vmatpush.xpose.msra.mxu0 0.0
    %560 = vmatpush.xpose.msra.mxu0 0.0
    %561 = vmatpush.xpose.msra.mxu0 0.0
    %562 = vmatpush.xpose.msra.mxu0 0.0
    %563 = vmatpush.xpose.msra.mxu0 0.0
    %564 = vmatpush.xpose.msra.mxu0 0.0
    %565 = vmatpush.xpose.msra.mxu0 0.0
    %566 = vmatpush.xpose.msra.mxu0 0.0
    %567 = vmatpush.xpose.msra.mxu0 0.0
    %568 = vmatpush.xpose.msra.mxu0 0.0
    %569 = vmatpush.xpose.msra.mxu0 0.0
    %570 = vmatpush.xpose.msra.mxu0 0.0
    %571 = vmatpush.xpose.msra.mxu0 0.0
    %572 = vmatpush.xpose.msra.mxu0 0.0
    %573 = vmatpush.xpose.msra.mxu0 %v485
    %574 = vmatmul.f32.gmra.mxu0 %v466
    %v575 = vpop.f32.mrf.mxu0
    %v576 = vadd.f32 %v556, %v575
    %577 = vdwg.mxu0
    %578 = vmatpush.xpose.msra.mxu0 0.0
    %579 = vmatpush.xpose.msra.mxu0 0.0
    %580 = vmatpush.xpose.msra.mxu0 0.0
    %581 = vmatpush.xpose.msra.mxu0 0.0
    %582 = vmatpush.xpose.msra.mxu0 0.0
    %583 = vmatpush.xpose.msra.mxu0 0.0
    %584 = vmatpush.xpose.msra.mxu0 0.0
    %585 = vmatpush.xpose.msra.mxu0 0.0
    %586 = vmatpush.xpose.msra.mxu0 0.0
    %587 = vmatpush.xpose.msra.mxu0 0.0
    %588 = vmatpush.xpose.msra.mxu0 0.0
    %589 = vmatpush.xpose.msra.mxu0 0.0
    %590 = vmatpush.xpose.msra.mxu0 0.0
    %591 = vmatpush.xpose.msra.mxu0 0.0
    %592 = vmatpush.xpose.msra.mxu0 0.0
    %593 = vmatpush.xpose.msra.mxu0 %v486
    %594 = vmatmul.f32.gmra.mxu0 %v467
    %v595 = vpop.f32.mrf.mxu0
    %v596 = vadd.f32 %v576, %v595
    %597 = vdwg.mxu0
    %598 = vmatpush.xpose.msra.mxu0 0.0
    %599 = vmatpush.xpose.msra.mxu0 0.0
    %600 = vmatpush.xpose.msra.mxu0 0.0
    %601 = vmatpush.xpose.msra.mxu0 0.0
    %602 = vmatpush.xpose.msra.mxu0 0.0
    %603 = vmatpush.xpose.msra.mxu0 0.0
    %604 = vmatpush.xpose.msra.mxu0 0.0
    %605 = vmatpush.xpose.msra.mxu0 0.0
    %606 = vmatpush.xpose.msra.mxu0 0.0
    %607 = vmatpush.xpose.msra.mxu0 0.0
    %608 = vmatpush.xpose.msra.mxu0 0.0
    %609 = vmatpush.xpose.msra.mxu0 0.0
    %610 = vmatpush.xpose.msra.mxu0 0.0
    %611 = vmatpush.xpose.msra.mxu0 0.0
    %612 = vmatpush.xpose.msra.mxu0 0.0
    %613 = vmatpush.xpose.msra.mxu0 %v487
    %614 = vmatmul.f32.gmra.mxu0 %v468
    %v615 = vpop.f32.mrf.mxu0
    %v616 = vadd.f32 %v596, %v615
    %617 = vdwg.mxu0
    %618 = vmatpush.xpose.msra.mxu0 0.0
    %619 = vmatpush.xpose.msra.mxu0 0.0
    %620 = vmatpush.xpose.msra.mxu0 0.0
    %621 = vmatpush.xpose.msra.mxu0 0.0
    %622 = vmatpush.xpose.msra.mxu0 0.0
    %623 = vmatpush.xpose.msra.mxu0 0.0
    %624 = vmatpush.xpose.msra.mxu0 0.0
    %625 = vmatpush.xpose.msra.mxu0 0.0
    %626 = vmatpush.xpose.msra.mxu0 0.0
    %627 = vmatpush.xpose.msra.mxu0 0.0
    %628 = vmatpush.xpose.msra.mxu0 0.0
    %629 = vmatpush.xpose.msra.mxu0 0.0
    %630 = vmatpush.xpose.msra.mxu0 0.0
    %631 = vmatpush.xpose.msra.mxu0 0.0
    %632 = vmatpush.xpose.msra.mxu0 0.0
    %633 = vmatpush.xpose.msra.mxu0 %v488
    %634 = vmatmul.f32.gmra.mxu0 %v469
    %v635 = vpop.f32.mrf.mxu0
    %v636 = vadd.f32 %v616, %v635
    %637 = vdwg.mxu0
    %638 = vmatpush.xpose.msra.mxu0 0.0
    %639 = vmatpush.xpose.msra.mxu0 0.0
    %640 = vmatpush.xpose.msra.mxu0 0.0
    %641 = vmatpush.xpose.msra.mxu0 0.0
    %642 = vmatpush.xpose.msra.mxu0 0.0
    %643 = vmatpush.xpose.msra.mxu0 0.0
    %644 = vmatpush.xpose.msra.mxu0 0.0
    %645 = vmatpush.xpose.msra.mxu0 0.0
    %646 = vmatpush.xpose.msra.mxu0 0.0
    %647 = vmatpush.xpose.msra.mxu0 0.0
    %648 = vmatpush.xpose.msra.mxu0 0.0
    %649 = vmatpush.xpose.msra.mxu0 0.0
    %650 = vmatpush.xpose.msra.mxu0 0.0
    %651 = vmatpush.xpose.msra.mxu0 0.0
    %652 = vmatpush.xpose.msra.mxu0 0.0
    %653 = vmatpush.xpose.msra.mxu0 %v489
    %654 = vmatmul.f32.gmra.mxu0 %v470
    %v655 = vpop.f32.mrf.mxu0
    %v656 = vadd.f32 %v636, %v655
    %657 = vdwg.mxu0
    %v658 = vadd.f32 %v459, %v656
    %659 = vst.msk [vmem:[#allocation4] sm:$0x3] %vm254, %v658
    // Predicated region
    $region22: #{tpu_custom_call.1} parent=1 // pred_check
      %p660 = pneg %p40
    $region23: #{tpu_custom_call.1} parent=1 // pred_check_branch
      %662 = sbr.rel (%p660) target = $region25
    $region24: #{tpu_custom_call.1} parent=1 // pred_region
      %v663 = vld [vmem:[#allocation2] sm:$0x3]
      %v664 = vld [vmem:[#allocation3] sm:$0x3]
      %v665 = vld [vmem:[#allocation4] sm:$0x3]
      %v666 = vlaneseq
      %v667 = vshrl.u32 %v666, 7
      %v668 = vlaneseq
      %v669 = vand.u32 %v668, 127
      %vm670 = vcmp.eq.s32.totalorder %v667, %v669
      %v671 = vsel %vm670, %v663, 0.0
      %v672 = vsel %vm670, %v665, 0.0
      %v673 = vsel %vm254, %v671, 0.0
      %674 = vadd.xlane.f32.xlu0 %v673
      %v675 = vpop.xlane.xlu0 %674
      %v676 = vrot.slane %v673, 4
      %v677 = vadd.f32 %v673, %v676
      %v678 = vrot.slane %v677, 2
      %v679 = vadd.f32 %v677, %v678
      %v680 = vrot.slane %v679, 1
      %v681 = vadd.f32 %v679, %v680
      %v682 = vsel %vm254, %v672, 0.0
      %683 = vadd.xlane.f32.xlu0 %v682
      %v684 = vpop.xlane.xlu0 %683
      %v685 = vrot.slane %v682, 4
      %v686 = vadd.f32 %v682, %v685
      %v687 = vrot.slane %v686, 2
      %v688 = vadd.f32 %v686, %v687
      %v689 = vrot.slane %v688, 1
      %v690 = vadd.f32 %v688, %v689
      %v691 = vadd.f32 %v675, %v681
      %v692 = vmul.f32 %v663, 2.0
      %v693 = vsub.f32 %v691, %v692
      %v694 = vmax.f32 %v693, 0.0
      %v695 = vadd.f32 %v684, %v690
      %v696 = vmul.f32 %v665, 2.0
      %v697 = vsub.f32 %v695, %v696
      %v698 = vmax.f32 %v697, 0.0
      %v699 = vadd.f32 %v675, %v690
      %v700 = vmul.f32 %v664, 2.0
      %v701 = vsub.f32 %v699, %v700
      %v702 = vmax.f32 %v701, 0.0
      %v703 = vsel %vm254, %v694, 0.0
      %704 = vadd.xlane.f32.xlu0 %v703
      %v705 = vpop.xlane.xlu0 %704
      %v706 = vrot.slane %v705, 4
      %v707 = vadd.f32 %v705, %v706
      %v708 = vrot.slane %v707, 2
      %v709 = vadd.f32 %v707, %v708
      %v710 = vrot.slane %v709, 1
      %v711 = vadd.f32 %v709, %v710
      %s712 = vtos %v711
      %v713 = vsel %vm254, %v698, 0.0
      %714 = vadd.xlane.f32.xlu0 %v713
      %v715 = vpop.xlane.xlu0 %714
      %v716 = vrot.slane %v715, 4
      %v717 = vadd.f32 %v715, %v716
      %v718 = vrot.slane %v717, 2
      %v719 = vadd.f32 %v717, %v718
      %v720 = vrot.slane %v719, 1
      %v721 = vadd.f32 %v719, %v720
      %s722 = vtos %v721
      %s723 = sadd.f32 %s712, %s722
      %v724 = vsel %vm254, %v702, 0.0
      %725 = vadd.xlane.f32.xlu0 %v724
      %v726 = vpop.xlane.xlu0 %725
      %v727 = vrot.slane %v726, 4
      %v728 = vadd.f32 %v726, %v727
      %v729 = vrot.slane %v728, 2
      %v730 = vadd.f32 %v728, %v729
      %v731 = vrot.slane %v730, 1
      %v732 = vadd.f32 %v730, %v731
      %s733 = vtos %v732
      %s734 = smul.f32 %s733, 2.0
      %s735 = sadd.f32 %s723, %s734
      %v736 = vrcp.pop 12.0
      %v737 = vmul.f32 12.0, %v736
      %v738 = vsub.f32 1.0, %v737
      %v739 = vmul.f32 %v736, %v738
      %v740 = vadd.f32 %v736, %v739
      %vm741 = vweird.f32 %v736
      %v742 = vsel %vm741, %v736, %v740
      %s743 = vtos %v742
      %s744 = smul.f32 %s735, %s743
      %v745 = vrcp.pop 4.0
      %v746 = vmul.f32 4.0, %v745
      %v747 = vsub.f32 1.0, %v746
      %v748 = vmul.f32 %v745, %v747
      %v749 = vadd.f32 %v745, %v748
      %vm750 = vweird.f32 %v745
      %v751 = vsel %vm750, %v745, %v749
      %s752 = vtos %v751
      %s753 = smul.f32 %s744, %s752
      %v754 = vstv %s753
      %v755 = vrcp.pop %v754
      %v756 = vmul.f32 %v754, %v755
      %v757 = vsub.f32 1.0, %v756
      %v758 = vmul.f32 %v755, %v757
      %v759 = vadd.f32 %v755, %v758
      %vm760 = vweird.f32 %v754
      %vm761 = vweird.f32 %v755
      %vm762 = vmor %vm760, %vm761
      %v763 = vsel %vm762, %v755, %v759
      %v764 = vand.u32 2147483647, %v754
      %vm765 = vcmp.eq.f32.partialorder %v764, 8.507059e+37
      %v766 = vand.u32 %v754, 2147483648
      %v767 = vor.u32 1.1754944e-38, %v766
      %v768 = vsel %vm765, %v767, %v763
      %s769 = vtos %v768
      %s770 = smul.f32 -1.0, %s769
      %v771 = vstv %s770
      %v772 = vmul.f32 %v694, %v771
      %v773 = vmul.f32 %v772, 1.442695
      %v774 = vpow.pop %v773
      %v775 = vsel %vm254, %v774, 0.0
      %776 = vadd.xlane.f32.xlu0 %v775
      %v777 = vpop.xlane.xlu0 %776
      %v778 = vrot.slane %v777, 4
      %v779 = vadd.f32 %v777, %v778
      %v780 = vrot.slane %v779, 2
      %v781 = vadd.f32 %v779, %v780
      %v782 = vrot.slane %v781, 1
      %v783 = vadd.f32 %v781, %v782
      %s784 = vtos %v783
      %s785 = sadd.f32 %s784, 0.0
      %v786 = vmul.f32 %v698, %v771
      %v787 = vmul.f32 %v786, 1.442695
      %v788 = vpow.pop %v787
      %v789 = vsel %vm254, %v788, 0.0
      %790 = vadd.xlane.f32.xlu0 %v789
      %v791 = vpop.xlane.xlu0 %790
      %v792 = vrot.slane %v791, 4
      %v793 = vadd.f32 %v791, %v792
      %v794 = vrot.slane %v793, 2
      %v795 = vadd.f32 %v793, %v794
      %v796 = vrot.slane %v795, 1
      %v797 = vadd.f32 %v795, %v796
      %s798 = vtos %v797
      %s799 = sadd.f32 %s785, %s798
      %v800 = vmul.f32 %v702, %v771
      %v801 = vmul.f32 %v800, 1.442695
      %v802 = vpow.pop %v801
      %v803 = vsel %vm254, %v802, 0.0
      %804 = vadd.xlane.f32.xlu0 %v803
      %v805 = vpop.xlane.xlu0 %804
      %v806 = vrot.slane %v805, 4
      %v807 = vadd.f32 %v805, %v806
      %v808 = vrot.slane %v807, 2
      %v809 = vadd.f32 %v807, %v808
      %v810 = vrot.slane %v809, 1
      %v811 = vadd.f32 %v809, %v810
      %s812 = vtos %v811
      %s813 = smul.f32 %s812, 2.0
      %s814 = ssub.f32 %s799, %s813
      %s815 = smul.f32 %s753, 2.0
      %v816 = vstv %s815
      %v817 = vrcp.pop %v816
      %v818 = vmul.f32 %v816, %v817
      %v819 = vsub.f32 1.0, %v818
      %v820 = vmul.f32 %v817, %v819
      %v821 = vadd.f32 %v817, %v820
      %vm822 = vweird.f32 %v816
      %vm823 = vweird.f32 %v817
      %vm824 = vmor %vm822, %vm823
      %v825 = vsel %vm824, %v817, %v821
      %v826 = vand.u32 2147483647, %v816
      %vm827 = vcmp.eq.f32.partialorder %v826, 8.507059e+37
      %v828 = vand.u32 %v816, 2147483648
      %v829 = vor.u32 1.1754944e-38, %v828
      %v830 = vsel %vm827, %v829, %v825
      %s831 = vtos %v830
      %s832 = smul.f32 -1.0, %s831
      %v833 = vstv %s832
      %v834 = vmul.f32 %v694, %v833
      %v835 = vmul.f32 %v834, 1.442695
      %v836 = vpow.pop %v835
      %v837 = vsel %vm254, %v836, 0.0
      %838 = vadd.xlane.f32.xlu0 %v837
      %v839 = vpop.xlane.xlu0 %838
      %v840 = vrot.slane %v839, 4
      %v841 = vadd.f32 %v839, %v840
      %v842 = vrot.slane %v841, 2
      %v843 = vadd.f32 %v841, %v842
      %v844 = vrot.slane %v843, 1
      %v845 = vadd.f32 %v843, %v844
      %s846 = vtos %v845
      %s847 = sadd.f32 %s814, %s846
      %v848 = vmul.f32 %v698, %v833
      %v849 = vmul.f32 %v848, 1.442695
      %v850 = vpow.pop %v849
      %v851 = vsel %vm254, %v850, 0.0
      %852 = vadd.xlane.f32.xlu0 %v851
      %v853 = vpop.xlane.xlu0 %852
      %v854 = vrot.slane %v853, 4
      %v855 = vadd.f32 %v853, %v854
      %v856 = vrot.slane %v855, 2
      %v857 = vadd.f32 %v855, %v856
      %v858 = vrot.slane %v857, 1
      %v859 = vadd.f32 %v857, %v858
      %s860 = vtos %v859
      %s861 = sadd.f32 %s847, %s860
      %v862 = vmul.f32 %v702, %v833
      %v863 = vmul.f32 %v862, 1.442695
      %v864 = vpow.pop %v863
      %v865 = vsel %vm254, %v864, 0.0
      %866 = vadd.xlane.f32.xlu0 %v865
      %v867 = vpop.xlane.xlu0 %866
      %v868 = vrot.slane %v867, 4
      %v869 = vadd.f32 %v867, %v868
      %v870 = vrot.slane %v869, 2
      %v871 = vadd.f32 %v869, %v870
      %v872 = vrot.slane %v871, 1
      %v873 = vadd.f32 %v871, %v872
      %s874 = vtos %v873
      %s875 = smul.f32 %s874, 2.0
      %s876 = ssub.f32 %s861, %s875
      %s877 = smul.f32 %s753, 4.0
      %v878 = vstv %s877
      %v879 = vrcp.pop %v878
      %v880 = vmul.f32 %v878, %v879
      %v881 = vsub.f32 1.0, %v880
      %v882 = vmul.f32 %v879, %v881
      %v883 = vadd.f32 %v879, %v882
      %vm884 = vweird.f32 %v878
      %vm885 = vweird.f32 %v879
      %vm886 = vmor %vm884, %vm885
      %v887 = vsel %vm886, %v879, %v883
      %v888 = vand.u32 2147483647, %v878
      %vm889 = vcmp.eq.f32.partialorder %v888, 8.507059e+37
      %v890 = vand.u32 %v878, 2147483648
      %v891 = vor.u32 1.1754944e-38, %v890
      %v892 = vsel %vm889, %v891, %v887
      %s893 = vtos %v892
      %s894 = smul.f32 -1.0, %s893
      %v895 = vstv %s894
      %v896 = vmul.f32 %v694, %v895
      %v897 = vmul.f32 %v896, 1.442695
      %v898 = vpow.pop %v897
      %v899 = vsel %vm254, %v898, 0.0
      %900 = vadd.xlane.f32.xlu0 %v899
      %v901 = vpop.xlane.xlu0 %900
      %v902 = vrot.slane %v901, 4
      %v903 = vadd.f32 %v901, %v902
      %v904 = vrot.slane %v903, 2
      %v905 = vadd.f32 %v903, %v904
      %v906 = vrot.slane %v905, 1
      %v907 = vadd.f32 %v905, %v906
      %s908 = vtos %v907
      %s909 = sadd.f32 %s876, %s908
      %v910 = vmul.f32 %v698, %v895
      %v911 = vmul.f32 %v910, 1.442695
      %v912 = vpow.pop %v911
      %v913 = vsel %vm254, %v912, 0.0
      %914 = vadd.xlane.f32.xlu0 %v913
      %v915 = vpop.xlane.xlu0 %914
      %v916 = vrot.slane %v915, 4
      %v917 = vadd.f32 %v915, %v916
      %v918 = vrot.slane %v917, 2
      %v919 = vadd.f32 %v917, %v918
      %v920 = vrot.slane %v919, 1
      %v921 = vadd.f32 %v919, %v920
      %s922 = vtos %v921
      %s923 = sadd.f32 %s909, %s922
      %v924 = vmul.f32 %v702, %v895
      %v925 = vmul.f32 %v924, 1.442695
      %v926 = vpow.pop %v925
      %v927 = vsel %vm254, %v926, 0.0
      %928 = vadd.xlane.f32.xlu0 %v927
      %v929 = vpop.xlane.xlu0 %928
      %v930 = vrot.slane %v929, 4
      %v931 = vadd.f32 %v929, %v930
      %v932 = vrot.slane %v931, 2
      %v933 = vadd.f32 %v931, %v932
      %v934 = vrot.slane %v933, 1
      %v935 = vadd.f32 %v933, %v934
      %s936 = vtos %v935
      %s937 = smul.f32 %s936, 2.0
      %s938 = ssub.f32 %s923, %s937
      %s939 = smul.f32 %s753, 8.0
      %v940 = vstv %s939
      %v941 = vrcp.pop %v940
      %v942 = vmul.f32 %v940, %v941
      %v943 = vsub.f32 1.0, %v942
      %v944 = vmul.f32 %v941, %v943
      %v945 = vadd.f32 %v941, %v944
      %vm946 = vweird.f32 %v940
      %vm947 = vweird.f32 %v941
      %vm948 = vmor %vm946, %vm947
      %v949 = vsel %vm948, %v941, %v945
      %v950 = vand.u32 2147483647, %v940
      %vm951 = vcmp.eq.f32.partialorder %v950, 8.507059e+37
      %v952 = vand.u32 %v940, 2147483648
      %v953 = vor.u32 1.1754944e-38, %v952
      %v954 = vsel %vm951, %v953, %v949
      %s955 = vtos %v954
      %s956 = smul.f32 -1.0, %s955
      %v957 = vstv %s956
      %v958 = vmul.f32 %v694, %v957
      %v959 = vmul.f32 %v958, 1.442695
      %v960 = vpow.pop %v959
      %v961 = vsel %vm254, %v960, 0.0
      %962 = vadd.xlane.f32.xlu0 %v961
      %v963 = vpop.xlane.xlu0 %962
      %v964 = vrot.slane %v963, 4
      %v965 = vadd.f32 %v963, %v964
      %v966 = vrot.slane %v965, 2
      %v967 = vadd.f32 %v965, %v966
      %v968 = vrot.slane %v967, 1
      %v969 = vadd.f32 %v967, %v968
      %s970 = vtos %v969
      %s971 = sadd.f32 %s938, %s970
      %v972 = vmul.f32 %v698, %v957
      %v973 = vmul.f32 %v972, 1.442695
      %v974 = vpow.pop %v973
      %v975 = vsel %vm254, %v974, 0.0
      %976 = vadd.xlane.f32.xlu0 %v975
      %v977 = vpop.xlane.xlu0 %976
      %v978 = vrot.slane %v977, 4
      %v979 = vadd.f32 %v977, %v978
      %v980 = vrot.slane %v979, 2
      %v981 = vadd.f32 %v979, %v980
      %v982 = vrot.slane %v981, 1
      %v983 = vadd.f32 %v981, %v982
      %s984 = vtos %v983
      %s985 = sadd.f32 %s971, %s984
      %v986 = vmul.f32 %v702, %v957
      %v987 = vmul.f32 %v986, 1.442695
      %v988 = vpow.pop %v987
      %v989 = vsel %vm254, %v988, 0.0
      %990 = vadd.xlane.f32.xlu0 %v989
      %v991 = vpop.xlane.xlu0 %990
      %v992 = vrot.slane %v991, 4
      %v993 = vadd.f32 %v991, %v992
      %v994 = vrot.slane %v993, 2
      %v995 = vadd.f32 %v993, %v994
      %v996 = vrot.slane %v995, 1
      %v997 = vadd.f32 %v995, %v996
      %s998 = vtos %v997
      %s999 = smul.f32 %s998, 2.0
      %s1000 = ssub.f32 %s985, %s999
      %s1001 = smul.f32 %s753, 16.0
      %v1002 = vstv %s1001
      %v1003 = vrcp.pop %v1002
      %v1004 = vmul.f32 %v1002, %v1003
      %v1005 = vsub.f32 1.0, %v1004
      %v1006 = vmul.f32 %v1003, %v1005
      %v1007 = vadd.f32 %v1003, %v1006
      %vm1008 = vweird.f32 %v1002
      %vm1009 = vweird.f32 %v1003
      %vm1010 = vmor %vm1008, %vm1009
      %v1011 = vsel %vm1010, %v1003, %v1007
      %v1012 = vand.u32 2147483647, %v1002
      %vm1013 = vcmp.eq.f32.partialorder %v1012, 8.507059e+37
      %v1014 = vand.u32 %v1002, 2147483648
      %v1015 = vor.u32 1.1754944e-38, %v1014
      %v1016 = vsel %vm1013, %v1015, %v1011
      %s1017 = vtos %v1016
      %s1018 = smul.f32 -1.0, %s1017
      %v1019 = vstv %s1018
      %v1020 = vmul.f32 %v694, %v1019
      %v1021 = vmul.f32 %v1020, 1.442695
      %v1022 = vpow.pop %v1021
      %v1023 = vsel %vm254, %v1022, 0.0
      %1024 = vadd.xlane.f32.xlu0 %v1023
      %v1025 = vpop.xlane.xlu0 %1024
      %v1026 = vrot.slane %v1025, 4
      %v1027 = vadd.f32 %v1025, %v1026
      %v1028 = vrot.slane %v1027, 2
      %v1029 = vadd.f32 %v1027, %v1028
      %v1030 = vrot.slane %v1029, 1
      %v1031 = vadd.f32 %v1029, %v1030
      %s1032 = vtos %v1031
      %s1033 = sadd.f32 %s1000, %s1032
      %v1034 = vmul.f32 %v698, %v1019
      %v1035 = vmul.f32 %v1034, 1.442695
      %v1036 = vpow.pop %v1035
      %v1037 = vsel %vm254, %v1036, 0.0
      %1038 = vadd.xlane.f32.xlu0 %v1037
      %v1039 = vpop.xlane.xlu0 %1038
      %v1040 = vrot.slane %v1039, 4
      %v1041 = vadd.f32 %v1039, %v1040
      %v1042 = vrot.slane %v1041, 2
      %v1043 = vadd.f32 %v1041, %v1042
      %v1044 = vrot.slane %v1043, 1
      %v1045 = vadd.f32 %v1043, %v1044
      %s1046 = vtos %v1045
      %s1047 = sadd.f32 %s1033, %s1046
      %v1048 = vmul.f32 %v702, %v1019
      %v1049 = vmul.f32 %v1048, 1.442695
      %v1050 = vpow.pop %v1049
      %v1051 = vsel %vm254, %v1050, 0.0
      %1052 = vadd.xlane.f32.xlu0 %v1051
      %v1053 = vpop.xlane.xlu0 %1052
      %v1054 = vrot.slane %v1053, 4
      %v1055 = vadd.f32 %v1053, %v1054
      %v1056 = vrot.slane %v1055, 2
      %v1057 = vadd.f32 %v1055, %v1056
      %v1058 = vrot.slane %v1057, 1
      %v1059 = vadd.f32 %v1057, %v1058
      %s1060 = vtos %v1059
      %s1061 = smul.f32 %s1060, 2.0
      %s1062 = ssub.f32 %s1047, %s1061
      %v1063 = vrcp.pop 4.0
      %v1064 = vmul.f32 4.0, %v1063
      %v1065 = vsub.f32 1.0, %v1064
      %v1066 = vmul.f32 %v1063, %v1065
      %v1067 = vadd.f32 %v1063, %v1066
      %vm1068 = vweird.f32 %v1063
      %v1069 = vsel %vm1068, %v1063, %v1067
      %s1070 = vtos %v1069
      %s1071 = smul.f32 %s1062, %s1070
      %v1072 = vstv %s1071
      %vm1073 = vcmask 0
      %1074 = vst.msk [vmem:[#allocation10] sm:$0x1] %vm1073, %v1072
    $region25: #{tpu_custom_call.1} parent=1 // pred_fallthru
      _
    // Predicated region
    $region26: #{tpu_custom_call.1} parent=1 // pred_check
      _
    $region27: #{tpu_custom_call.1} parent=1 // pred_check_branch
      %1076 = sbr.rel (0) target = $region29
    $region28: #{tpu_custom_call.1} parent=1 // pred_region
      %1078 = vsyncadd [#allocation7], 0
      %s1080 = sshll.u32 [#allocation10], 4
      %s1081 = int_to_ptr.vmem [resolvable:$true] %s1080
      %s1082 = sshll.u32 %s2, 4
      %s1083 = int_to_ptr.hbm [resolvable:$true] %s1082
      %1085 = dma.vmem_to_hbm [thread:$0]  %s1081, 16, %s1083, [#allocation7]
    $region29: #{tpu_custom_call.1} parent=1 // pred_fallthru
      _
    // Predicated region
    $region30: #{tpu_custom_call.1} parent=1 // pred_check
      _
    $region31: #{tpu_custom_call.1} parent=1 // pred_check_branch
      %1087 = sbr.rel (0) target = $region33
    $region32: #{tpu_custom_call.1} parent=1 // pred_region
      %1089 = dma.done [#allocation7], 16
    $region33: #{tpu_custom_call.1} parent=1 // pred_fallthru
      _
    %1090 = vsyncpa [#allocation6], 1
    %1091 = vsyncpa [#allocation9], 1
    %1092 = vsyncpa [#allocation7], 1

</llo_original>
